<compile_context>
chip_gen: v5e
topology: v5e:2x2
jax: 0.10.0
libtpu: 0.0.40
codegen_flags: <defaults>
</compile_context>

<pallas_src>
import functools

import jax
import jax.numpy as jnp
import numpy as np
from jax.experimental import pallas as pl
from jax.experimental.pallas import tpu as pltpu

_BN_EPS = 1e-5
_LANE = 128


def _round_up(n, m):
    return ((n + m - 1) // m) * m


def _make_qmodel_kernel(fc1, fc2, out_pad):
    """Kernel closed over the static feature widths (for static vec slices)."""

    def kernel(x_ref, w1_ref, w2_ref, w3_ref, vec_ref, o_ref):
        # vec_ref rows: 0=g1, 1=beta1, 2=g2, 3=beta2, 4=b3 (rest zero padding).
        def bn_relu(h, g, beta):
            # Training-mode BatchNorm1d: per-feature mean / biased variance over
            # the batch (single pass), fused scale/shift, then ReLU.
            mu = jnp.mean(h, axis=0, keepdims=True)
            ex2 = jnp.mean(h * h, axis=0, keepdims=True)
            var = jnp.maximum(ex2 - mu * mu, 0.0)        # guard f32 cancellation
            scale = g * jax.lax.rsqrt(var + _BN_EPS)     # rsqrt -> EUP slot
            shift = beta - mu * scale
            return jnp.maximum(h * scale + shift, 0.0)

        # ---- Linear 1 (bias cancelled by BN) + BN + ReLU ----
        h = jnp.dot(x_ref[...], w1_ref[...], preferred_element_type=jnp.float32)
        h = bn_relu(h, vec_ref[0:1, :fc1], vec_ref[1:2, :fc1])

        # ---- Linear 2 (bias cancelled by BN) + BN + ReLU ----
        h = jnp.dot(h.astype(jnp.bfloat16), w2_ref[...],
                    preferred_element_type=jnp.float32)
        h = bn_relu(h, vec_ref[2:3, :fc2], vec_ref[3:4, :fc2])

        # ---- Linear 3 (head, lane-padded) + bias ----
        out = jnp.dot(h.astype(jnp.bfloat16), w3_ref[...],
                      preferred_element_type=jnp.float32)
        out = out + vec_ref[4:5, :out_pad]
        o_ref[...] = out.astype(o_ref.dtype)             # lane-dense, unmasked vst

    return kernel


def qmodel_forward(x, params, action_dim):
    """Fused QModel forward; returns (B, action_dim) f32."""
    w1, w2, w3, vecs = params["w1"], params["w2"], params["w3"], params["vecs"]
    B = x.shape[0]
    state_pad, fc1 = w1.shape
    fc2 = w2.shape[1]
    out_pad = w3.shape[1]

    # Lane-dense, bf16 input (matmul operand is bf16 anyway).
    if x.shape[1] != state_pad:
        x = jnp.pad(x, ((0, 0), (0, state_pad - x.shape[1])))
    x = x.astype(jnp.bfloat16)

    args = (x, w1, w2, w3, vecs)

    flops = 2 * B * (state_pad * fc1 + fc1 * fc2 + fc2 * out_pad)
    bytes_accessed = sum(int(np.prod(a.shape)) * a.dtype.itemsize for a in args)
    bytes_accessed += B * out_pad * 4
    cost = pl.CostEstimate(flops=flops,
                           transcendentals=fc1 + fc2,    # rsqrt per feature
                           bytes_accessed=bytes_accessed)

    vmem = pl.BlockSpec(memory_space=pltpu.MemorySpace.VMEM)
    out_padded = pl.pallas_call(
        _make_qmodel_kernel(fc1, fc2, out_pad),
        out_shape=jax.ShapeDtypeStruct((B, out_pad), jnp.float32),
        in_specs=[vmem] * len(args),
        out_specs=vmem,
        cost_estimate=cost,
    )(*args)
    return out_padded[:, :action_dim]


def init_params(key, state_dim, action_dim, fc1, fc2):
    """xavier_uniform weights (matches weights_init), BN gamma=1 / beta=0,
    PyTorch-default uniform head bias.  Weights stored bf16 for the MXU;
    state_dim (w1 rows) and the head output dim are zero-padded to a multiple
    of 128 (exact: padded inputs/outputs are zero / sliced away).  The five
    per-feature vectors are packed into one sublane-aligned (8, W) f32 array."""
    k1, k2, k3, kb = jax.random.split(key, 4)

    def xavier(k, fan_in, fan_out):
        limit = float(np.sqrt(6.0 / (fan_in + fan_out)))
        return jax.random.uniform(k, (fan_in, fan_out), jnp.float32, -limit, limit)

    state_pad = _round_up(state_dim, _LANE)
    out_pad = _round_up(action_dim, _LANE)
    W = max(fc1, fc2, out_pad)

    w1 = jnp.pad(xavier(k1, state_dim, fc1), ((0, state_pad - state_dim), (0, 0)))
    w2 = xavier(k2, fc1, fc2)
    w3 = jnp.pad(xavier(k3, fc2, action_dim), ((0, 0), (0, out_pad - action_dim)))

    # nn.Linear default bias init for the head (pre-BN biases are dropped —
    # they cancel exactly through training-mode BatchNorm).
    bound = 1.0 / float(np.sqrt(fc2))
    b3 = jax.random.uniform(kb, (action_dim,), jnp.float32, -bound, bound)
    b3 = jnp.pad(b3, (0, out_pad - action_dim))

    vecs = jnp.zeros((8, W), jnp.float32)
    vecs = vecs.at[0, :fc1].set(1.0)        # gamma1
    vecs = vecs.at[2, :fc2].set(1.0)        # gamma2
    vecs = vecs.at[4, :out_pad].set(b3)     # head bias
    # rows 1, 3 are beta1/beta2 (= 0); rows 5-7 are sublane padding.

    return dict(
        w1=w1.astype(jnp.bfloat16),
        w2=w2.astype(jnp.bfloat16),
        w3=w3.astype(jnp.bfloat16),
        vecs=vecs,
    )


def qmodel_reference(x, p, action_dim):
    """Pure-JAX reference mirroring the kernel's mixed precision
    (bf16 matmul operands, f32 accumulation, f32 two-pass BN / ReLU)."""
    state_pad, fc1 = p["w1"].shape
    fc2 = p["w2"].shape[1]
    out_pad = p["w3"].shape[1]
    vecs = p["vecs"]
    g1, beta1 = vecs[0, :fc1], vecs[1, :fc1]
    g2, beta2 = vecs[2, :fc2], vecs[3, :fc2]
    b3 = vecs[4, :out_pad]

    xpad = jnp.pad(x, ((0, 0), (0, state_pad - x.shape[1])))

    def dot(a, w):
        return jnp.dot(a.astype(jnp.bfloat16), w, preferred_element_type=jnp.float32)

    def bn_relu(h, g, b):
        mu = jnp.mean(h, axis=0, keepdims=True)
        var = jnp.mean(jnp.square(h - mu), axis=0, keepdims=True)  # biased variance
        return jnp.maximum((h - mu) / jnp.sqrt(var + _BN_EPS) * g + b, 0.0)

    h = bn_relu(dot(xpad, p["w1"]), g1, beta1)
    h = bn_relu(dot(h, p["w2"]), g2, beta2)
    return (dot(h, p["w3"]) + b3)[:, :action_dim]


if __name__ == "__main__":
    # Small but MXU-friendly shapes: batch=128 rows (full sublane occupancy),
    # state_dim=32 (lane-padded to 128 inside), fc1=fc2=256, action_dim=8
    # (head lane-padded to 128 inside).
    B, STATE_DIM, FC1, FC2, ACTION_DIM = 128, 32, 256, 256, 8

    key = jax.random.PRNGKey(0)
    kx, kp = jax.random.split(key)
    x = jax.random.normal(kx, (B, STATE_DIM), jnp.float32)
    params = init_params(kp, STATE_DIM, ACTION_DIM, FC1, FC2)

    out = jax.block_until_ready(qmodel_forward(x, params, ACTION_DIM))
    ref = jax.block_until_ready(qmodel_reference(x, params, ACTION_DIM))

    assert out.shape == (B, ACTION_DIM)
    np.testing.assert_allclose(np.asarray(out), np.asarray(ref), atol=1e-2, rtol=1e-2)

    print("KERNEL_OK")
</pallas_src>

<mosaic_0001>
module attributes {stable_mosaic.version = 11 : i64} {
  func.func @kernel(%arg0: memref<128x128xbf16, #tpu.memory_space<vmem>>, %arg1: memref<128x256xbf16, #tpu.memory_space<vmem>>, %arg2: memref<256x256xbf16, #tpu.memory_space<vmem>>, %arg3: memref<256x128xbf16, #tpu.memory_space<vmem>>, %arg4: memref<8x256xf32, #tpu.memory_space<vmem>>, %arg5: memref<128x128xf32, #tpu.memory_space<vmem>>) attributes {dimension_semantics = [], scalar_prefetch = 0 : i64, scratch_operands = 0 : i64, tpu.core_type = #tpu.core_type<tc>} {
    %c0 = arith.constant 0 : index
    %c0_0 = arith.constant 0 : index
    %0 = vector.load %arg0[%c0, %c0_0] : memref<128x128xbf16, #tpu.memory_space<vmem>>, vector<128x128xbf16>
    %c0_1 = arith.constant 0 : index
    %c0_2 = arith.constant 0 : index
    %1 = vector.load %arg1[%c0_1, %c0_2] : memref<128x256xbf16, #tpu.memory_space<vmem>>, vector<128x256xbf16>
    %cst = arith.constant dense<0.000000e+00> : vector<128x256xf32>
    %2 = tpu.matmul %0, %1, %cst {dimension_numbers = #tpu.dot_dimension_numbers<[1], [0], [0], [1], [0, 0, 1, 1], [], []>} : vector<128x128xbf16>, vector<128x256xbf16>, vector<128x256xf32> -> vector<128x256xf32>
    %c0_3 = arith.constant 0 : index
    %c0_4 = arith.constant 0 : index
    %3 = vector.load %arg4[%c0_3, %c0_4] : memref<8x256xf32, #tpu.memory_space<vmem>>, vector<1x256xf32>
    %c1 = arith.constant 1 : index
    %c0_5 = arith.constant 0 : index
    %4 = vector.load %arg4[%c1, %c0_5] : memref<8x256xf32, #tpu.memory_space<vmem>>, vector<1x256xf32>
    %cst_6 = arith.constant dense<0.000000e+00> : vector<256xf32>
    %5 = vector.multi_reduction <add>, %2, %cst_6 [0] : vector<128x256xf32> to vector<256xf32>
    %6 = vector.shape_cast %5 : vector<256xf32> to vector<1x256xf32>
    %cst_7 = arith.constant 1.280000e+02 : f32
    %7 = vector.broadcast %cst_7 : f32 to vector<1x256xf32>
    %8 = arith.divf %6, %7 : vector<1x256xf32>
    %9 = arith.mulf %2, %2 : vector<128x256xf32>
    %cst_8 = arith.constant dense<0.000000e+00> : vector<256xf32>
    %10 = vector.multi_reduction <add>, %9, %cst_8 [0] : vector<128x256xf32> to vector<256xf32>
    %11 = vector.shape_cast %10 : vector<256xf32> to vector<1x256xf32>
    %cst_9 = arith.constant 1.280000e+02 : f32
    %12 = vector.broadcast %cst_9 : f32 to vector<1x256xf32>
    %13 = arith.divf %11, %12 : vector<1x256xf32>
    %14 = arith.mulf %8, %8 : vector<1x256xf32>
    %15 = arith.subf %13, %14 : vector<1x256xf32>
    %cst_10 = arith.constant 0.000000e+00 : f32
    %16 = vector.broadcast %cst_10 : f32 to vector<1x256xf32>
    %17 = arith.maximumf %15, %16 : vector<1x256xf32>
    %cst_11 = arith.constant 9.99999974E-6 : f32
    %18 = vector.broadcast %cst_11 : f32 to vector<1x256xf32>
    %19 = arith.addf %17, %18 : vector<1x256xf32>
    %20 = math.rsqrt %19 : vector<1x256xf32>
    %21 = arith.mulf %3, %20 : vector<1x256xf32>
    %22 = arith.mulf %8, %21 : vector<1x256xf32>
    %23 = arith.subf %4, %22 : vector<1x256xf32>
    %24 = vector.broadcast %21 : vector<1x256xf32> to vector<128x256xf32>
    %25 = arith.mulf %2, %24 : vector<128x256xf32>
    %26 = vector.broadcast %23 : vector<1x256xf32> to vector<128x256xf32>
    %27 = arith.addf %25, %26 : vector<128x256xf32>
    %cst_12 = arith.constant 0.000000e+00 : f32
    %28 = vector.broadcast %cst_12 : f32 to vector<128x256xf32>
    %29 = arith.maximumf %27, %28 : vector<128x256xf32>
    %30 = arith.truncf %29 : vector<128x256xf32> to vector<128x256xbf16>
    %c0_13 = arith.constant 0 : index
    %c0_14 = arith.constant 0 : index
    %31 = vector.load %arg2[%c0_13, %c0_14] : memref<256x256xbf16, #tpu.memory_space<vmem>>, vector<256x256xbf16>
    %cst_15 = arith.constant dense<0.000000e+00> : vector<128x256xf32>
    %32 = tpu.matmul %30, %31, %cst_15 {dimension_numbers = #tpu.dot_dimension_numbers<[1], [0], [0], [1], [0, 0, 1, 1], [], []>} : vector<128x256xbf16>, vector<256x256xbf16>, vector<128x256xf32> -> vector<128x256xf32>
    %c2 = arith.constant 2 : index
    %c0_16 = arith.constant 0 : index
    %33 = vector.load %arg4[%c2, %c0_16] : memref<8x256xf32, #tpu.memory_space<vmem>>, vector<1x256xf32>
    %c3 = arith.constant 3 : index
    %c0_17 = arith.constant 0 : index
    %34 = vector.load %arg4[%c3, %c0_17] : memref<8x256xf32, #tpu.memory_space<vmem>>, vector<1x256xf32>
    %cst_18 = arith.constant dense<0.000000e+00> : vector<256xf32>
    %35 = vector.multi_reduction <add>, %32, %cst_18 [0] : vector<128x256xf32> to vector<256xf32>
    %36 = vector.shape_cast %35 : vector<256xf32> to vector<1x256xf32>
    %cst_19 = arith.constant 1.280000e+02 : f32
    %37 = vector.broadcast %cst_19 : f32 to vector<1x256xf32>
    %38 = arith.divf %36, %37 : vector<1x256xf32>
    %39 = arith.mulf %32, %32 : vector<128x256xf32>
    %cst_20 = arith.constant dense<0.000000e+00> : vector<256xf32>
    %40 = vector.multi_reduction <add>, %39, %cst_20 [0] : vector<128x256xf32> to vector<256xf32>
    %41 = vector.shape_cast %40 : vector<256xf32> to vector<1x256xf32>
    %cst_21 = arith.constant 1.280000e+02 : f32
    %42 = vector.broadcast %cst_21 : f32 to vector<1x256xf32>
    %43 = arith.divf %41, %42 : vector<1x256xf32>
    %44 = arith.mulf %38, %38 : vector<1x256xf32>
    %45 = arith.subf %43, %44 : vector<1x256xf32>
    %cst_22 = arith.constant 0.000000e+00 : f32
    %46 = vector.broadcast %cst_22 : f32 to vector<1x256xf32>
    %47 = arith.maximumf %45, %46 : vector<1x256xf32>
    %cst_23 = arith.constant 9.99999974E-6 : f32
    %48 = vector.broadcast %cst_23 : f32 to vector<1x256xf32>
    %49 = arith.addf %47, %48 : vector<1x256xf32>
    %50 = math.rsqrt %49 : vector<1x256xf32>
    %51 = arith.mulf %33, %50 : vector<1x256xf32>
    %52 = arith.mulf %38, %51 : vector<1x256xf32>
    %53 = arith.subf %34, %52 : vector<1x256xf32>
    %54 = vector.broadcast %51 : vector<1x256xf32> to vector<128x256xf32>
    %55 = arith.mulf %32, %54 : vector<128x256xf32>
    %56 = vector.broadcast %53 : vector<1x256xf32> to vector<128x256xf32>
    %57 = arith.addf %55, %56 : vector<128x256xf32>
    %cst_24 = arith.constant 0.000000e+00 : f32
    %58 = vector.broadcast %cst_24 : f32 to vector<128x256xf32>
    %59 = arith.maximumf %57, %58 : vector<128x256xf32>
    %60 = arith.truncf %59 : vector<128x256xf32> to vector<128x256xbf16>
    %c0_25 = arith.constant 0 : index
    %c0_26 = arith.constant 0 : index
    %61 = vector.load %arg3[%c0_25, %c0_26] : memref<256x128xbf16, #tpu.memory_space<vmem>>, vector<256x128xbf16>
    %cst_27 = arith.constant dense<0.000000e+00> : vector<128x128xf32>
    %62 = tpu.matmul %60, %61, %cst_27 {dimension_numbers = #tpu.dot_dimension_numbers<[1], [0], [0], [1], [0, 0, 1, 1], [], []>} : vector<128x256xbf16>, vector<256x128xbf16>, vector<128x128xf32> -> vector<128x128xf32>
    %c4 = arith.constant 4 : index
    %c0_28 = arith.constant 0 : index
    %63 = vector.load %arg4[%c4, %c0_28] : memref<8x256xf32, #tpu.memory_space<vmem>>, vector<1x128xf32>
    %64 = vector.broadcast %63 : vector<1x128xf32> to vector<128x128xf32>
    %65 = arith.addf %62, %64 : vector<128x128xf32>
    %c0_29 = arith.constant 0 : index
    %c0_30 = arith.constant 0 : index
    %66 = vector.load %arg5[%c0_29, %c0_30] : memref<128x128xf32, #tpu.memory_space<vmem>>, vector<128x128xf32>
    tpu.vector_store %arg5[%c0_29, %c0_30], %65 {strides = array<i32>} : memref<128x128xf32, #tpu.memory_space<vmem>>, vector<128x128xf32>,
    return
  }
}

</mosaic_0001>

<llo_original>
// kernel: tpu_custom_call.1
$region0: #{tpu_custom_call.1}
  #allocation0 [shape = 'u32[]', space=smem, size = 0x4, offset = 0x4, fixed_abs, tag = 'smem constant byte address 0x4 - core index']
  #allocation1 [shape = 'u32[72,128]{1,0:T(1,128)}', space=vmem, size = 0x9000, scoped, tag = 'internal scratch']
  %s0 = inlined_call_operand.hbm [shape: bf16[128,128], index: 0, kind: input, shape index: {}]
  %s1 = inlined_call_operand.hbm [shape: bf16[128,256], index: 1, kind: input, shape index: {}]
  %s2 = inlined_call_operand.hbm [shape: bf16[256,256], index: 2, kind: input, shape index: {}]
  %s3 = inlined_call_operand.hbm [shape: bf16[256,128], index: 3, kind: input, shape index: {}]
  %s4 = inlined_call_operand.hbm [shape: f32[8,256], index: 4, kind: input, shape index: {}]
  %s5 = inlined_call_operand.hbm [shape: f32[128,128], index: 5, kind: output, shape index: {}]
  %s6 = sld [smem:[#allocation0]]
  $region50: #{tpu_custom_call.1} parent=0
    _
  %s8 = ssub.s32 1, %s6
  %s9 = scalar_select 0, %s8, %s6
  $region1: #{tpu_custom_call.1} parent=0
    #allocation2 [shape = 'u8[32768]{0}', space=vmem, size = 0x8000, scoped, tag = 'input window, operand 0, single buffered']
    #allocation3 [shape = 's32[1]{0}', space=sflag, size = 0x4, scoped, tag = 'scoped memory for tpu_custom_call.1']
    #allocation4 [shape = 's32[1]{0}', space=sflag, size = 0x4, scoped, tag = 'scoped memory for tpu_custom_call.1']
    #allocation5 [shape = 'u8[65536]{0}', space=vmem, size = 0x10000, scoped, tag = 'input window, operand 1, single buffered']
    #allocation6 [shape = 's32[1]{0}', space=sflag, size = 0x4, scoped, tag = 'scoped memory for tpu_custom_call.1']
    #allocation7 [shape = 'u8[131072]{0}', space=vmem, size = 0x20000, scoped, tag = 'input window, operand 2, single buffered']
    #allocation8 [shape = 'u8[65536]{0}', space=vmem, size = 0x10000, scoped, tag = 'input window, operand 3, single buffered']
    #allocation9 [shape = 's32[1]{0}', space=sflag, size = 0x4, scoped, tag = 'scoped memory for tpu_custom_call.1']
    #allocation10 [shape = 'u8[8192]{0}', space=vmem, size = 0x2000, scoped, tag = 'input window, operand 4, single buffered']
    #allocation11 [shape = 'u8[65536]{0}', space=vmem, size = 0x10000, scoped, tag = 'output window, operand 0, single buffered']
    %10 = vsyncpa [#allocation3], 0
    %11 = vsyncpa [#allocation6], 0
    %12 = vsyncpa [#allocation9], 0
    %13 = vsyncpa [#allocation4], 0
    // Predicated region
    $region2: #{tpu_custom_call.1} parent=1 // pred_check
      _
    $region3: #{tpu_custom_call.1} parent=1 // pred_check_branch
      %15 = sbr.rel (0) target = $region5
    $region4: #{tpu_custom_call.1} parent=1 // pred_region
      %17 = vsyncadd [#allocation3], 0
      %s18 = sshll.u32 %s0, 4
      %s19 = int_to_ptr.hbm [resolvable:$true] %s18
      %s20 = sshll.u32 [#allocation2], 4
      %s21 = int_to_ptr.vmem [resolvable:$true] %s20
      %26 = dma.hbm_to_vmem [thread:$0]  %s19, 1024, %s21, [#allocation3], 64, 64, 4
    $region5: #{tpu_custom_call.1} parent=1 // pred_fallthru
      _
    // Predicated region
    $region6: #{tpu_custom_call.1} parent=1 // pred_check
      _
    $region7: #{tpu_custom_call.1} parent=1 // pred_check_branch
      %28 = sbr.rel (0) target = $region9
    $region8: #{tpu_custom_call.1} parent=1 // pred_region
      %30 = vsyncadd [#allocation6], 0
      %s31 = sshll.u32 %s1, 4
      %s32 = int_to_ptr.hbm [resolvable:$true] %s31
      %s33 = sshll.u32 [#allocation5], 4
      %s34 = int_to_ptr.vmem [resolvable:$true] %s33
      %39 = dma.hbm_to_vmem [thread:$0]  %s32, 2048, %s34, [#allocation6], 128, 128, 8
    $region9: #{tpu_custom_call.1} parent=1 // pred_fallthru
      _
    // Predicated region
    $region10: #{tpu_custom_call.1} parent=1 // pred_check
      _
    $region11: #{tpu_custom_call.1} parent=1 // pred_check_branch
      %41 = sbr.rel (0) target = $region13
    $region12: #{tpu_custom_call.1} parent=1 // pred_region
      %43 = vsyncadd [#allocation6], 0
      %s44 = sshll.u32 %s2, 4
      %s45 = int_to_ptr.hbm [resolvable:$true] %s44
      %s46 = sshll.u32 [#allocation7], 4
      %s47 = int_to_ptr.vmem [resolvable:$true] %s46
      %52 = dma.hbm_to_vmem [thread:$0]  %s45, 4096, %s47, [#allocation6], 128, 128, 8
    $region13: #{tpu_custom_call.1} parent=1 // pred_fallthru
      _
    // Predicated region
    $region14: #{tpu_custom_call.1} parent=1 // pred_check
      _
    $region15: #{tpu_custom_call.1} parent=1 // pred_check_branch
      %54 = sbr.rel (0) target = $region17
    $region16: #{tpu_custom_call.1} parent=1 // pred_region
      %56 = vsyncadd [#allocation9], 0
      %s57 = sshll.u32 %s3, 4
      %s58 = int_to_ptr.hbm [resolvable:$true] %s57
      %s59 = sshll.u32 [#allocation8], 4
      %s60 = int_to_ptr.vmem [resolvable:$true] %s59
      %65 = dma.hbm_to_vmem [thread:$0]  %s58, 2048, %s60, [#allocation9], 64, 64, 4
    $region17: #{tpu_custom_call.1} parent=1 // pred_fallthru
      _
    // Predicated region
    $region18: #{tpu_custom_call.1} parent=1 // pred_check
      _
    $region19: #{tpu_custom_call.1} parent=1 // pred_check_branch
      %67 = sbr.rel (0) target = $region21
    $region20: #{tpu_custom_call.1} parent=1 // pred_region
      %69 = vsyncadd [#allocation9], 0
      %s71 = sshll.u32 %s4, 4
      %s72 = int_to_ptr.hbm [resolvable:$true] %s71
      %s73 = sshll.u32 [#allocation10], 4
      %s74 = int_to_ptr.vmem [resolvable:$true] %s73
      %76 = dma.hbm_to_vmem [thread:$0]  %s72, 256, %s74, [#allocation9]
    $region21: #{tpu_custom_call.1} parent=1 // pred_fallthru
      _
    // Predicated region
    $region22: #{tpu_custom_call.1} parent=1 // pred_check
      _
    $region23: #{tpu_custom_call.1} parent=1 // pred_check_branch
      %78 = sbr.rel (0) target = $region25
    $region24: #{tpu_custom_call.1} parent=1 // pred_region
      %80 = dma.done [#allocation3], 1024
    $region25: #{tpu_custom_call.1} parent=1 // pred_fallthru
      _
    // Predicated region
    $region26: #{tpu_custom_call.1} parent=1 // pred_check
      _
    $region27: #{tpu_custom_call.1} parent=1 // pred_check_branch
      %82 = sbr.rel (0) target = $region29
    $region28: #{tpu_custom_call.1} parent=1 // pred_region
      %84 = dma.done [#allocation6], 2048
    $region29: #{tpu_custom_call.1} parent=1 // pred_fallthru
      _
    // Predicated region
    $region30: #{tpu_custom_call.1} parent=1 // pred_check
      _
    $region31: #{tpu_custom_call.1} parent=1 // pred_check_branch
      %86 = sbr.rel (0) target = $region33
    $region32: #{tpu_custom_call.1} parent=1 // pred_region
      %88 = dma.done [#allocation6], 4096
    $region33: #{tpu_custom_call.1} parent=1 // pred_fallthru
      _
    // Predicated region
    $region34: #{tpu_custom_call.1} parent=1 // pred_check
      _
    $region35: #{tpu_custom_call.1} parent=1 // pred_check_branch
      %90 = sbr.rel (0) target = $region37
    $region36: #{tpu_custom_call.1} parent=1 // pred_region
      %92 = dma.done [#allocation9], 2048
    $region37: #{tpu_custom_call.1} parent=1 // pred_fallthru
      _
    // Predicated region
    $region38: #{tpu_custom_call.1} parent=1 // pred_check
      _
    $region39: #{tpu_custom_call.1} parent=1 // pred_check_branch
      %94 = sbr.rel (0) target = $region41
    $region40: #{tpu_custom_call.1} parent=1 // pred_region
      %96 = dma.done [#allocation9], 256
    $region41: #{tpu_custom_call.1} parent=1 // pred_fallthru
      _
    %v97 = vld [vmem:[#allocation2] sm:$0xf]
    %v98 = vld [vmem:[#allocation2 + $0x4] sm:$0xf]
    %v99 = vld [vmem:[#allocation2 + $0x8] sm:$0xf]
    %v100 = vld [vmem:[#allocation2 + $0xc] sm:$0xf]
    %v101 = vld [vmem:[#allocation2 + $0x10] sm:$0xf]
    %v102 = vld [vmem:[#allocation2 + $0x14] sm:$0xf]
    %v103 = vld [vmem:[#allocation2 + $0x18] sm:$0xf]
    %v104 = vld [vmem:[#allocation2 + $0x1c] sm:$0xf]
    %v105 = vld [vmem:[#allocation2 + $0x20] sm:$0xf]
    %v106 = vld [vmem:[#allocation2 + $0x24] sm:$0xf]
    %v107 = vld [vmem:[#allocation2 + $0x28] sm:$0xf]
    %v108 = vld [vmem:[#allocation2 + $0x2c] sm:$0xf]
    %v109 = vld [vmem:[#allocation2 + $0x30] sm:$0xf]
    %v110 = vld [vmem:[#allocation2 + $0x34] sm:$0xf]
    %v111 = vld [vmem:[#allocation2 + $0x38] sm:$0xf]
    %v112 = vld [vmem:[#allocation2 + $0x3c] sm:$0xf]
    %v113 = vld [vmem:[#allocation5] sm:$0xff]
    %v114 = vld [vmem:[#allocation5 + $0x8] sm:$0xff]
    %v115 = vld [vmem:[#allocation5 + $0x10] sm:$0xff]
    %v116 = vld [vmem:[#allocation5 + $0x18] sm:$0xff]
    %v117 = vld [vmem:[#allocation5 + $0x20] sm:$0xff]
    %v118 = vld [vmem:[#allocation5 + $0x28] sm:$0xff]
    %v119 = vld [vmem:[#allocation5 + $0x30] sm:$0xff]
    %v120 = vld [vmem:[#allocation5 + $0x38] sm:$0xff]
    %v121 = vld [vmem:[#allocation5 + $0x40] sm:$0xff]
    %v122 = vld [vmem:[#allocation5 + $0x48] sm:$0xff]
    %v123 = vld [vmem:[#allocation5 + $0x50] sm:$0xff]
    %v124 = vld [vmem:[#allocation5 + $0x58] sm:$0xff]
    %v125 = vld [vmem:[#allocation5 + $0x60] sm:$0xff]
    %v126 = vld [vmem:[#allocation5 + $0x68] sm:$0xff]
    %v127 = vld [vmem:[#allocation5 + $0x70] sm:$0xff]
    %v128 = vld [vmem:[#allocation5 + $0x78] sm:$0xff]
    %v145 = vunpack.c.l.b16 %v97
    %v146 = vunpack.c.l.b16 %v98
    %v147 = vunpack.c.l.b16 %v99
    %v148 = vunpack.c.l.b16 %v100
    %v149 = vunpack.c.l.b16 %v101
    %v150 = vunpack.c.l.b16 %v102
    %v151 = vunpack.c.l.b16 %v103
    %v152 = vunpack.c.l.b16 %v104
    %v153 = vunpack.c.l.b16 %v105
    %v154 = vunpack.c.l.b16 %v106
    %v155 = vunpack.c.l.b16 %v107
    %v156 = vunpack.c.l.b16 %v108
    %v157 = vunpack.c.l.b16 %v109
    %v158 = vunpack.c.l.b16 %v110
    %v159 = vunpack.c.l.b16 %v111
    %v160 = vunpack.c.l.b16 %v112
    %v161 = vpack.c.b16 %v146, %v145
    %v162 = vpack.c.b16 %v148, %v147
    %v163 = vpack.c.b16 %v150, %v149
    %v164 = vpack.c.b16 %v152, %v151
    %v165 = vpack.c.b16 %v154, %v153
    %v166 = vpack.c.b16 %v156, %v155
    %v167 = vpack.c.b16 %v158, %v157
    %v168 = vpack.c.b16 %v160, %v159
    %v193 = vunpack.c.l.b16 %v113
    %v194 = vunpack.c.h.b16 %v113
    %v195 = vunpack.c.l.b16 %v114
    %v196 = vunpack.c.h.b16 %v114
    %v197 = vunpack.c.l.b16 %v115
    %v198 = vunpack.c.h.b16 %v115
    %v199 = vunpack.c.l.b16 %v116
    %v200 = vunpack.c.h.b16 %v116
    %v201 = vunpack.c.l.b16 %v117
    %v202 = vunpack.c.h.b16 %v117
    %v203 = vunpack.c.l.b16 %v118
    %v204 = vunpack.c.h.b16 %v118
    %v205 = vunpack.c.l.b16 %v119
    %v206 = vunpack.c.h.b16 %v119
    %v207 = vunpack.c.l.b16 %v120
    %v208 = vunpack.c.h.b16 %v120
    %v209 = vunpack.c.l.b16 %v121
    %v210 = vunpack.c.h.b16 %v121
    %v211 = vunpack.c.l.b16 %v122
    %v212 = vunpack.c.h.b16 %v122
    %v213 = vunpack.c.l.b16 %v123
    %v214 = vunpack.c.h.b16 %v123
    %v215 = vunpack.c.l.b16 %v124
    %v216 = vunpack.c.h.b16 %v124
    %v217 = vunpack.c.l.b16 %v125
    %v218 = vunpack.c.h.b16 %v125
    %v219 = vunpack.c.l.b16 %v126
    %v220 = vunpack.c.h.b16 %v126
    %v221 = vunpack.c.l.b16 %v127
    %v222 = vunpack.c.h.b16 %v127
    %v223 = vunpack.c.l.b16 %v128
    %v224 = vunpack.c.h.b16 %v128
    %v225 = vpack.c.b16 %v195, %v193
    %v226 = vpack.c.b16 %v196, %v194
    %v227 = vpack.c.b16 %v199, %v197
    %v228 = vpack.c.b16 %v200, %v198
    %v229 = vpack.c.b16 %v203, %v201
    %v230 = vpack.c.b16 %v204, %v202
    %v231 = vpack.c.b16 %v207, %v205
    %v232 = vpack.c.b16 %v208, %v206
    %v233 = vpack.c.b16 %v211, %v209
    %v234 = vpack.c.b16 %v212, %v210
    %v235 = vpack.c.b16 %v215, %v213
    %v236 = vpack.c.b16 %v216, %v214
    %v237 = vpack.c.b16 %v219, %v217
    %v238 = vpack.c.b16 %v220, %v218
    %v239 = vpack.c.b16 %v223, %v221
    %v240 = vpack.c.b16 %v224, %v222
    %257 = vmatpush.bf16.msra.mxu0 %v239
    %258 = vmatpush.bf16.msra.mxu0 %v237
    %259 = vmatpush.bf16.msra.mxu0 %v235
    %260 = vmatpush.bf16.msra.mxu0 %v233
    %261 = vmatpush.bf16.msra.mxu0 %v231
    %262 = vmatpush.bf16.msra.mxu0 %v229
    %263 = vmatpush.bf16.msra.mxu0 %v227
    %264 = vmatpush.bf16.msra.mxu0 %v225
    %265 = vmatmul.bf16.gmra.mxu0 %v161
    %v266 = vpop.f32.mrf.mxu0
    %v267 = vadd.f32 0.0, %v266
    %v268 = vpop.f32.mrf.mxu0
    %v269 = vadd.f32 0.0, %v268
    %270 = vmatmul.bf16.gmra.mxu0 %v162
    %v271 = vpop.f32.mrf.mxu0
    %v272 = vadd.f32 0.0, %v271
    %v273 = vpop.f32.mrf.mxu0
    %v274 = vadd.f32 0.0, %v273
    %275 = vmatmul.bf16.gmra.mxu0 %v163
    %v276 = vpop.f32.mrf.mxu0
    %v277 = vadd.f32 0.0, %v276
    %v278 = vpop.f32.mrf.mxu0
    %v279 = vadd.f32 0.0, %v278
    %280 = vmatmul.bf16.gmra.mxu0 %v164
    %v281 = vpop.f32.mrf.mxu0
    %v282 = vadd.f32 0.0, %v281
    %v283 = vpop.f32.mrf.mxu0
    %v284 = vadd.f32 0.0, %v283
    %285 = vmatmul.bf16.gmra.mxu0 %v165
    %v286 = vpop.f32.mrf.mxu0
    %v287 = vadd.f32 0.0, %v286
    %v288 = vpop.f32.mrf.mxu0
    %v289 = vadd.f32 0.0, %v288
    %290 = vmatmul.bf16.gmra.mxu0 %v166
    %v291 = vpop.f32.mrf.mxu0
    %v292 = vadd.f32 0.0, %v291
    %v293 = vpop.f32.mrf.mxu0
    %v294 = vadd.f32 0.0, %v293
    %295 = vmatmul.bf16.gmra.mxu0 %v167
    %v296 = vpop.f32.mrf.mxu0
    %v297 = vadd.f32 0.0, %v296
    %v298 = vpop.f32.mrf.mxu0
    %v299 = vadd.f32 0.0, %v298
    %300 = vmatmul.bf16.gmra.mxu0 %v168
    %v301 = vpop.f32.mrf.mxu0
    %v302 = vadd.f32 0.0, %v301
    %v303 = vpop.f32.mrf.mxu0
    %v304 = vadd.f32 0.0, %v303
    %305 = vdwg.mxu0
    %306 = vmatpush.bf16.msra.mxu0 %v240
    %307 = vmatpush.bf16.msra.mxu0 %v238
    %308 = vmatpush.bf16.msra.mxu0 %v236
    %309 = vmatpush.bf16.msra.mxu0 %v234
    %310 = vmatpush.bf16.msra.mxu0 %v232
    %311 = vmatpush.bf16.msra.mxu0 %v230
    %312 = vmatpush.bf16.msra.mxu0 %v228
    %313 = vmatpush.bf16.msra.mxu0 %v226
    %314 = vmatmul.bf16.gmra.mxu0 %v161
    %v315 = vpop.f32.mrf.mxu0
    %v316 = vadd.f32 0.0, %v315
    %v317 = vpop.f32.mrf.mxu0
    %v318 = vadd.f32 0.0, %v317
    %319 = vmatmul.bf16.gmra.mxu0 %v162
    %v320 = vpop.f32.mrf.mxu0
    %v321 = vadd.f32 0.0, %v320
    %v322 = vpop.f32.mrf.mxu0
    %v323 = vadd.f32 0.0, %v322
    %324 = vmatmul.bf16.gmra.mxu0 %v163
    %v325 = vpop.f32.mrf.mxu0
    %v326 = vadd.f32 0.0, %v325
    %v327 = vpop.f32.mrf.mxu0
    %v328 = vadd.f32 0.0, %v327
    %329 = vmatmul.bf16.gmra.mxu0 %v164
    %v330 = vpop.f32.mrf.mxu0
    %v331 = vadd.f32 0.0, %v330
    %v332 = vpop.f32.mrf.mxu0
    %v333 = vadd.f32 0.0, %v332
    %334 = vmatmul.bf16.gmra.mxu0 %v165
    %v335 = vpop.f32.mrf.mxu0
    %v336 = vadd.f32 0.0, %v335
    %v337 = vpop.f32.mrf.mxu0
    %v338 = vadd.f32 0.0, %v337
    %339 = vmatmul.bf16.gmra.mxu0 %v166
    %v340 = vpop.f32.mrf.mxu0
    %v341 = vadd.f32 0.0, %v340
    %v342 = vpop.f32.mrf.mxu0
    %v343 = vadd.f32 0.0, %v342
    %344 = vmatmul.bf16.gmra.mxu0 %v167
    %v345 = vpop.f32.mrf.mxu0
    %v346 = vadd.f32 0.0, %v345
    %v347 = vpop.f32.mrf.mxu0
    %v348 = vadd.f32 0.0, %v347
    %349 = vmatmul.bf16.gmra.mxu0 %v168
    %v350 = vpop.f32.mrf.mxu0
    %v351 = vadd.f32 0.0, %v350
    %v352 = vpop.f32.mrf.mxu0
    %v353 = vadd.f32 0.0, %v352
    %354 = vdwg.mxu0
    %v355 = vld [vmem:[#allocation10] ss:$8 sm:$0x3]
    %s356 = scalar_lea.vmem [#allocation10], 1
    %v357 = vld [vmem:[%s356] ss:$8 sm:$0x3]
    %v358 = vadd.f32 %v267, %v269
    %v359 = vadd.f32 %v358, %v272
    %v360 = vadd.f32 %v359, %v274
    %v361 = vadd.f32 %v360, %v277
    %v362 = vadd.f32 %v361, %v279
    %v363 = vadd.f32 %v362, %v282
    %v364 = vadd.f32 %v363, %v284
    %v365 = vadd.f32 %v364, %v287
    %v366 = vadd.f32 %v365, %v289
    %v367 = vadd.f32 %v366, %v292
    %v368 = vadd.f32 %v367, %v294
    %v369 = vadd.f32 %v368, %v297
    %v370 = vadd.f32 %v369, %v299
    %v371 = vadd.f32 %v370, %v302
    %v372 = vadd.f32 %v371, %v304
    %v373 = vrot.slane %v372, 4
    %v374 = vadd.f32 %v372, %v373
    %v375 = vrot.slane %v374, 2
    %v376 = vadd.f32 %v374, %v375
    %v377 = vrot.slane %v376, 1
    %v378 = vadd.f32 %v376, %v377
    %v379 = vadd.f32 %v316, %v318
    %v380 = vadd.f32 %v379, %v321
    %v381 = vadd.f32 %v380, %v323
    %v382 = vadd.f32 %v381, %v326
    %v383 = vadd.f32 %v382, %v328
    %v384 = vadd.f32 %v383, %v331
    %v385 = vadd.f32 %v384, %v333
    %v386 = vadd.f32 %v385, %v336
    %v387 = vadd.f32 %v386, %v338
    %v388 = vadd.f32 %v387, %v341
    %v389 = vadd.f32 %v388, %v343
    %v390 = vadd.f32 %v389, %v346
    %v391 = vadd.f32 %v390, %v348
    %v392 = vadd.f32 %v391, %v351
    %v393 = vadd.f32 %v392, %v353
    %v394 = vrot.slane %v393, 4
    %v395 = vadd.f32 %v393, %v394
    %v396 = vrot.slane %v395, 2
    %v397 = vadd.f32 %v395, %v396
    %v398 = vrot.slane %v397, 1
    %v399 = vadd.f32 %v397, %v398
    %v400 = vrcp.pop 128.0
    %v401 = vmul.f32 128.0, %v400
    %v402 = vsub.f32 1.0, %v401
    %v403 = vmul.f32 %v400, %v402
    %v404 = vadd.f32 %v400, %v403
    %vm405 = vweird.f32 %v400
    %v406 = vsel %vm405, %v400, %v404
    %v407 = vmul.f32 %v378, %v406
    %v408 = vmul.f32 %v399, %v406
    %v409 = vmul.f32 %v267, %v267
    %v410 = vmul.f32 %v316, %v316
    %v411 = vmul.f32 %v269, %v269
    %v412 = vmul.f32 %v318, %v318
    %v413 = vmul.f32 %v272, %v272
    %v414 = vmul.f32 %v321, %v321
    %v415 = vmul.f32 %v274, %v274
    %v416 = vmul.f32 %v323, %v323
    %v417 = vmul.f32 %v277, %v277
    %v418 = vmul.f32 %v326, %v326
    %v419 = vmul.f32 %v279, %v279
    %v420 = vmul.f32 %v328, %v328
    %v421 = vmul.f32 %v282, %v282
    %v422 = vmul.f32 %v331, %v331
    %v423 = vmul.f32 %v284, %v284
    %v424 = vmul.f32 %v333, %v333
    %v425 = vmul.f32 %v287, %v287
    %v426 = vmul.f32 %v336, %v336
    %v427 = vmul.f32 %v289, %v289
    %v428 = vmul.f32 %v338, %v338
    %v429 = vmul.f32 %v292, %v292
    %v430 = vmul.f32 %v341, %v341
    %v431 = vmul.f32 %v294, %v294
    %v432 = vmul.f32 %v343, %v343
    %v433 = vmul.f32 %v297, %v297
    %v434 = vmul.f32 %v346, %v346
    %v435 = vmul.f32 %v299, %v299
    %v436 = vmul.f32 %v348, %v348
    %v437 = vmul.f32 %v302, %v302
    %v438 = vmul.f32 %v351, %v351
    %v439 = vmul.f32 %v304, %v304
    %v440 = vmul.f32 %v353, %v353
    %v441 = vadd.f32 %v409, %v411
    %v442 = vadd.f32 %v441, %v413
    %v443 = vadd.f32 %v442, %v415
    %v444 = vadd.f32 %v443, %v417
    %v445 = vadd.f32 %v444, %v419
    %v446 = vadd.f32 %v445, %v421
    %v447 = vadd.f32 %v446, %v423
    %v448 = vadd.f32 %v447, %v425
    %v449 = vadd.f32 %v448, %v427
    %v450 = vadd.f32 %v449, %v429
    %v451 = vadd.f32 %v450, %v431
    %v452 = vadd.f32 %v451, %v433
    %v453 = vadd.f32 %v452, %v435
    %v454 = vadd.f32 %v453, %v437
    %v455 = vadd.f32 %v454, %v439
    %v456 = vrot.slane %v455, 4
    %v457 = vadd.f32 %v455, %v456
    %v458 = vrot.slane %v457, 2
    %v459 = vadd.f32 %v457, %v458
    %v460 = vrot.slane %v459, 1
    %v461 = vadd.f32 %v459, %v460
    %v462 = vadd.f32 %v410, %v412
    %v463 = vadd.f32 %v462, %v414
    %v464 = vadd.f32 %v463, %v416
    %v465 = vadd.f32 %v464, %v418
    %v466 = vadd.f32 %v465, %v420
    %v467 = vadd.f32 %v466, %v422
    %v468 = vadd.f32 %v467, %v424
    %v469 = vadd.f32 %v468, %v426
    %v470 = vadd.f32 %v469, %v428
    %v471 = vadd.f32 %v470, %v430
    %v472 = vadd.f32 %v471, %v432
    %v473 = vadd.f32 %v472, %v434
    %v474 = vadd.f32 %v473, %v436
    %v475 = vadd.f32 %v474, %v438
    %v476 = vadd.f32 %v475, %v440
    %v477 = vrot.slane %v476, 4
    %v478 = vadd.f32 %v476, %v477
    %v479 = vrot.slane %v478, 2
    %v480 = vadd.f32 %v478, %v479
    %v481 = vrot.slane %v480, 1
    %v482 = vadd.f32 %v480, %v481
    %v483 = vmul.f32 %v461, %v406
    %v484 = vmul.f32 %v482, %v406
    %v485 = vmul.f32 %v407, %v407
    %v486 = vmul.f32 %v408, %v408
    %v487 = vsub.f32 %v483, %v485
    %v488 = vsub.f32 %v484, %v486
    %v489 = vmax.f32 %v487, 0.0
    %v490 = vmax.f32 %v488, 0.0
    %v491 = vadd.f32 %v489, 1e-05
    %v492 = vadd.f32 %v490, 1e-05
    %v493 = vrsqrt.pop %v491
    %v494 = vmul.f32 %v493, %v491
    %v495 = vmul.f32 %v494, %v493
    %v496 = vmul.f32 0.5, %v495
    %v497 = vsub.f32 1.5, %v496
    %v498 = vmul.f32 %v493, %v497
    %vm499 = vweird.f32 %v491
    %vm500 = vweird.f32 %v493
    %vm501 = vmor %vm499, %vm500
    %v502 = vsel %vm501, %v493, %v498
    %v503 = vrsqrt.pop %v492
    %v504 = vmul.f32 %v503, %v492
    %v505 = vmul.f32 %v504, %v503
    %v506 = vmul.f32 0.5, %v505
    %v507 = vsub.f32 1.5, %v506
    %v508 = vmul.f32 %v503, %v507
    %vm509 = vweird.f32 %v492
    %vm510 = vweird.f32 %v503
    %vm511 = vmor %vm509, %vm510
    %v512 = vsel %vm511, %v503, %v508
    %v515 = vrot.slane %v512, 7
    %vm516 = vcmask 1040384
    %v517 = vsel %vm516, %v502, %v515
    %v519 = vmul.f32 %v355, %v517
    %v521 = vperm.slane %v519, 0
    %v522 = vperm.slane %v519, 1
    %v525 = vmul.f32 %v407, %v521
    %v526 = vmul.f32 %v408, %v522
    %v529 = vrot.slane %v526, 7
    %v530 = vsel %vm516, %v525, %v529
    %v532 = vsub.f32 %v357, %v530
    %v533 = vmul.f32 %v267, %v521
    %v534 = vmul.f32 %v316, %v522
    %v535 = vmul.f32 %v269, %v521
    %v536 = vmul.f32 %v318, %v522
    %v537 = vmul.f32 %v272, %v521
    %v538 = vmul.f32 %v321, %v522
    %v539 = vmul.f32 %v274, %v521
    %v540 = vmul.f32 %v323, %v522
    %v541 = vmul.f32 %v277, %v521
    %v542 = vmul.f32 %v326, %v522
    %v543 = vmul.f32 %v279, %v521
    %v544 = vmul.f32 %v328, %v522
    %v545 = vmul.f32 %v282, %v521
    %v546 = vmul.f32 %v331, %v522
    %v547 = vmul.f32 %v284, %v521
    %v548 = vmul.f32 %v333, %v522
    %v549 = vmul.f32 %v287, %v521
    %v550 = vmul.f32 %v336, %v522
    %v551 = vmul.f32 %v289, %v521
    %v552 = vmul.f32 %v338, %v522
    %v553 = vmul.f32 %v292, %v521
    %v554 = vmul.f32 %v341, %v522
    %v555 = vmul.f32 %v294, %v521
    %v556 = vmul.f32 %v343, %v522
    %v557 = vmul.f32 %v297, %v521
    %v558 = vmul.f32 %v346, %v522
    %v559 = vmul.f32 %v299, %v521
    %v560 = vmul.f32 %v348, %v522
    %v561 = vmul.f32 %v302, %v521
    %v562 = vmul.f32 %v351, %v522
    %v563 = vmul.f32 %v304, %v521
    %v564 = vmul.f32 %v353, %v522
    %v566 = vperm.slane %v532, 0
    %v567 = vperm.slane %v532, 1
    %v570 = vadd.f32 %v533, %v566
    %v571 = vadd.f32 %v534, %v567
    %v572 = vadd.f32 %v535, %v566
    %v573 = vadd.f32 %v536, %v567
    %v574 = vadd.f32 %v537, %v566
    %v575 = vadd.f32 %v538, %v567
    %v576 = vadd.f32 %v539, %v566
    %v577 = vadd.f32 %v540, %v567
    %v578 = vadd.f32 %v541, %v566
    %v579 = vadd.f32 %v542, %v567
    %v580 = vadd.f32 %v543, %v566
    %v581 = vadd.f32 %v544, %v567
    %v582 = vadd.f32 %v545, %v566
    %v583 = vadd.f32 %v546, %v567
    %v584 = vadd.f32 %v547, %v566
    %v585 = vadd.f32 %v548, %v567
    %v586 = vadd.f32 %v549, %v566
    %v587 = vadd.f32 %v550, %v567
    %v588 = vadd.f32 %v551, %v566
    %v589 = vadd.f32 %v552, %v567
    %v590 = vadd.f32 %v553, %v566
    %v591 = vadd.f32 %v554, %v567
    %v592 = vadd.f32 %v555, %v566
    %v593 = vadd.f32 %v556, %v567
    %v594 = vadd.f32 %v557, %v566
    %v595 = vadd.f32 %v558, %v567
    %v596 = vadd.f32 %v559, %v566
    %v597 = vadd.f32 %v560, %v567
    %v598 = vadd.f32 %v561, %v566
    %v599 = vadd.f32 %v562, %v567
    %v600 = vadd.f32 %v563, %v566
    %v601 = vadd.f32 %v564, %v567
    %v602 = vmax.f32 %v570, 0.0
    %v603 = vmax.f32 %v571, 0.0
    %v604 = vmax.f32 %v572, 0.0
    %v605 = vmax.f32 %v573, 0.0
    %v606 = vmax.f32 %v574, 0.0
    %v607 = vmax.f32 %v575, 0.0
    %v608 = vmax.f32 %v576, 0.0
    %v609 = vmax.f32 %v577, 0.0
    %v610 = vmax.f32 %v578, 0.0
    %v611 = vmax.f32 %v579, 0.0
    %v612 = vmax.f32 %v580, 0.0
    %v613 = vmax.f32 %v581, 0.0
    %v614 = vmax.f32 %v582, 0.0
    %v615 = vmax.f32 %v583, 0.0
    %v616 = vmax.f32 %v584, 0.0
    %v617 = vmax.f32 %v585, 0.0
    %v618 = vmax.f32 %v586, 0.0
    %v619 = vmax.f32 %v587, 0.0
    %v620 = vmax.f32 %v588, 0.0
    %v621 = vmax.f32 %v589, 0.0
    %v622 = vmax.f32 %v590, 0.0
    %v623 = vmax.f32 %v591, 0.0
    %v624 = vmax.f32 %v592, 0.0
    %v625 = vmax.f32 %v593, 0.0
    %v626 = vmax.f32 %v594, 0.0
    %v627 = vmax.f32 %v595, 0.0
    %v628 = vmax.f32 %v596, 0.0
    %v629 = vmax.f32 %v597, 0.0
    %v630 = vmax.f32 %v598, 0.0
    %v631 = vmax.f32 %v599, 0.0
    %v632 = vmax.f32 %v600, 0.0
    %v633 = vmax.f32 %v601, 0.0
    %v634 = vpack.c.bf16 %v604, %v602
    %v635 = vpack.c.bf16 %v605, %v603
    %v636 = vpack.c.bf16 %v608, %v606
    %v637 = vpack.c.bf16 %v609, %v607
    %v638 = vpack.c.bf16 %v612, %v610
    %v639 = vpack.c.bf16 %v613, %v611
    %v640 = vpack.c.bf16 %v616, %v614
    %v641 = vpack.c.bf16 %v617, %v615
    %v642 = vpack.c.bf16 %v620, %v618
    %v643 = vpack.c.bf16 %v621, %v619
    %v644 = vpack.c.bf16 %v624, %v622
    %v645 = vpack.c.bf16 %v625, %v623
    %v646 = vpack.c.bf16 %v628, %v626
    %v647 = vpack.c.bf16 %v629, %v627
    %v648 = vpack.c.bf16 %v632, %v630
    %v649 = vpack.c.bf16 %v633, %v631
    %v650 = vld [vmem:[#allocation7] sm:$0xff]
    %v651 = vld [vmem:[#allocation7 + $0x8] sm:$0xff]
    %v652 = vld [vmem:[#allocation7 + $0x10] sm:$0xff]
    %v653 = vld [vmem:[#allocation7 + $0x18] sm:$0xff]
    %v654 = vld [vmem:[#allocation7 + $0x20] sm:$0xff]
    %v655 = vld [vmem:[#allocation7 + $0x28] sm:$0xff]
    %v656 = vld [vmem:[#allocation7 + $0x30] sm:$0xff]
    %v657 = vld [vmem:[#allocation7 + $0x38] sm:$0xff]
    %v658 = vld [vmem:[#allocation7 + $0x40] sm:$0xff]
    %v659 = vld [vmem:[#allocation7 + $0x48] sm:$0xff]
    %v660 = vld [vmem:[#allocation7 + $0x50] sm:$0xff]
    %v661 = vld [vmem:[#allocation7 + $0x58] sm:$0xff]
    %v662 = vld [vmem:[#allocation7 + $0x60] sm:$0xff]
    %v663 = vld [vmem:[#allocation7 + $0x68] sm:$0xff]
    %v664 = vld [vmem:[#allocation7 + $0x70] sm:$0xff]
    %v665 = vld [vmem:[#allocation7 + $0x78] sm:$0xff]
    %v666 = vld [vmem:[#allocation7 + $0x80] sm:$0xff]
    %v667 = vld [vmem:[#allocation7 + $0x88] sm:$0xff]
    %v668 = vld [vmem:[#allocation7 + $0x90] sm:$0xff]
    %v669 = vld [vmem:[#allocation7 + $0x98] sm:$0xff]
    %v670 = vld [vmem:[#allocation7 + $0xa0] sm:$0xff]
    %v671 = vld [vmem:[#allocation7 + $0xa8] sm:$0xff]
    %v672 = vld [vmem:[#allocation7 + $0xb0] sm:$0xff]
    %v673 = vld [vmem:[#allocation7 + $0xb8] sm:$0xff]
    %v674 = vld [vmem:[#allocation7 + $0xc0] sm:$0xff]
    %v675 = vld [vmem:[#allocation7 + $0xc8] sm:$0xff]
    %v676 = vld [vmem:[#allocation7 + $0xd0] sm:$0xff]
    %v677 = vld [vmem:[#allocation7 + $0xd8] sm:$0xff]
    %v678 = vld [vmem:[#allocation7 + $0xe0] sm:$0xff]
    %v679 = vld [vmem:[#allocation7 + $0xe8] sm:$0xff]
    %v680 = vld [vmem:[#allocation7 + $0xf0] sm:$0xff]
    %v681 = vld [vmem:[#allocation7 + $0xf8] sm:$0xff]
    %v714 = vunpack.c.l.b16 %v650
    %v715 = vunpack.c.h.b16 %v650
    %v716 = vunpack.c.l.b16 %v651
    %v717 = vunpack.c.h.b16 %v651
    %v718 = vunpack.c.l.b16 %v652
    %v719 = vunpack.c.h.b16 %v652
    %v720 = vunpack.c.l.b16 %v653
    %v721 = vunpack.c.h.b16 %v653
    %v722 = vunpack.c.l.b16 %v654
    %v723 = vunpack.c.h.b16 %v654
    %v724 = vunpack.c.l.b16 %v655
    %v725 = vunpack.c.h.b16 %v655
    %v726 = vunpack.c.l.b16 %v656
    %v727 = vunpack.c.h.b16 %v656
    %v728 = vunpack.c.l.b16 %v657
    %v729 = vunpack.c.h.b16 %v657
    %v730 = vunpack.c.l.b16 %v658
    %v731 = vunpack.c.h.b16 %v658
    %v732 = vunpack.c.l.b16 %v659
    %v733 = vunpack.c.h.b16 %v659
    %v734 = vunpack.c.l.b16 %v660
    %v735 = vunpack.c.h.b16 %v660
    %v736 = vunpack.c.l.b16 %v661
    %v737 = vunpack.c.h.b16 %v661
    %v738 = vunpack.c.l.b16 %v662
    %v739 = vunpack.c.h.b16 %v662
    %v740 = vunpack.c.l.b16 %v663
    %v741 = vunpack.c.h.b16 %v663
    %v742 = vunpack.c.l.b16 %v664
    %v743 = vunpack.c.h.b16 %v664
    %v744 = vunpack.c.l.b16 %v665
    %v745 = vunpack.c.h.b16 %v665
    %v746 = vunpack.c.l.b16 %v666
    %v747 = vunpack.c.h.b16 %v666
    %v748 = vunpack.c.l.b16 %v667
    %v749 = vunpack.c.h.b16 %v667
    %v750 = vunpack.c.l.b16 %v668
    %v751 = vunpack.c.h.b16 %v668
    %v752 = vunpack.c.l.b16 %v669
    %v753 = vunpack.c.h.b16 %v669
    %v754 = vunpack.c.l.b16 %v670
    %v755 = vunpack.c.h.b16 %v670
    %v756 = vunpack.c.l.b16 %v671
    %v757 = vunpack.c.h.b16 %v671
    %v758 = vunpack.c.l.b16 %v672
    %v759 = vunpack.c.h.b16 %v672
    %v760 = vunpack.c.l.b16 %v673
    %v761 = vunpack.c.h.b16 %v673
    %v762 = vunpack.c.l.b16 %v674
    %v763 = vunpack.c.h.b16 %v674
    %v764 = vunpack.c.l.b16 %v675
    %v765 = vunpack.c.h.b16 %v675
    %v766 = vunpack.c.l.b16 %v676
    %v767 = vunpack.c.h.b16 %v676
    %v768 = vunpack.c.l.b16 %v677
    %v769 = vunpack.c.h.b16 %v677
    %v770 = vunpack.c.l.b16 %v678
    %v771 = vunpack.c.h.b16 %v678
    %v772 = vunpack.c.l.b16 %v679
    %v773 = vunpack.c.h.b16 %v679
    %v774 = vunpack.c.l.b16 %v680
    %v775 = vunpack.c.h.b16 %v680
    %v776 = vunpack.c.l.b16 %v681
    %v777 = vunpack.c.h.b16 %v681
    %v778 = vpack.c.b16 %v716, %v714
    %v779 = vpack.c.b16 %v717, %v715
    %v780 = vpack.c.b16 %v720, %v718
    %v781 = vpack.c.b16 %v721, %v719
    %v782 = vpack.c.b16 %v724, %v722
    %v783 = vpack.c.b16 %v725, %v723
    %v784 = vpack.c.b16 %v728, %v726
    %v785 = vpack.c.b16 %v729, %v727
    %v786 = vpack.c.b16 %v732, %v730
    %v787 = vpack.c.b16 %v733, %v731
    %v788 = vpack.c.b16 %v736, %v734
    %v789 = vpack.c.b16 %v737, %v735
    %v790 = vpack.c.b16 %v740, %v738
    %v791 = vpack.c.b16 %v741, %v739
    %v792 = vpack.c.b16 %v744, %v742
    %v793 = vpack.c.b16 %v745, %v743
    %v794 = vpack.c.b16 %v748, %v746
    %v795 = vpack.c.b16 %v749, %v747
    %v796 = vpack.c.b16 %v752, %v750
    %v797 = vpack.c.b16 %v753, %v751
    %v798 = vpack.c.b16 %v756, %v754
    %v799 = vpack.c.b16 %v757, %v755
    %v800 = vpack.c.b16 %v760, %v758
    %v801 = vpack.c.b16 %v761, %v759
    %v802 = vpack.c.b16 %v764, %v762
    %v803 = vpack.c.b16 %v765, %v763
    %v804 = vpack.c.b16 %v768, %v766
    %v805 = vpack.c.b16 %v769, %v767
    %v806 = vpack.c.b16 %v772, %v770
    %v807 = vpack.c.b16 %v773, %v771
    %v808 = vpack.c.b16 %v776, %v774
    %v809 = vpack.c.b16 %v777, %v775
    %842 = vmatpush.bf16.msra.mxu0 %v792
    %843 = vmatpush.bf16.msra.mxu0 %v790
    %844 = vmatpush.bf16.msra.mxu0 %v788
    %845 = vmatpush.bf16.msra.mxu0 %v786
    %846 = vmatpush.bf16.msra.mxu0 %v784
    %847 = vmatpush.bf16.msra.mxu0 %v782
    %848 = vmatpush.bf16.msra.mxu0 %v780
    %849 = vmatpush.bf16.msra.mxu0 %v778
    %850 = vmatmul.bf16.gmra.mxu0 %v634
    %v851 = vpop.f32.mrf.mxu0
    %v852 = vadd.f32 0.0, %v851
    %v853 = vpop.f32.mrf.mxu0
    %v854 = vadd.f32 0.0, %v853
    %855 = vmatmul.bf16.gmra.mxu0 %v636
    %v856 = vpop.f32.mrf.mxu0
    %v857 = vadd.f32 0.0, %v856
    %v858 = vpop.f32.mrf.mxu0
    %v859 = vadd.f32 0.0, %v858
    %860 = vmatmul.bf16.gmra.mxu0 %v638
    %v861 = vpop.f32.mrf.mxu0
    %v862 = vadd.f32 0.0, %v861
    %v863 = vpop.f32.mrf.mxu0
    %v864 = vadd.f32 0.0, %v863
    %865 = vmatmul.bf16.gmra.mxu0 %v640
    %v866 = vpop.f32.mrf.mxu0
    %v867 = vadd.f32 0.0, %v866
    %v868 = vpop.f32.mrf.mxu0
    %v869 = vadd.f32 0.0, %v868
    %870 = vmatmul.bf16.gmra.mxu0 %v642
    %v871 = vpop.f32.mrf.mxu0
    %v872 = vadd.f32 0.0, %v871
    %v873 = vpop.f32.mrf.mxu0
    %v874 = vadd.f32 0.0, %v873
    %875 = vmatmul.bf16.gmra.mxu0 %v644
    %v876 = vpop.f32.mrf.mxu0
    %v877 = vadd.f32 0.0, %v876
    %v878 = vpop.f32.mrf.mxu0
    %v879 = vadd.f32 0.0, %v878
    %880 = vmatmul.bf16.gmra.mxu0 %v646
    %v881 = vpop.f32.mrf.mxu0
    %v882 = vadd.f32 0.0, %v881
    %v883 = vpop.f32.mrf.mxu0
    %v884 = vadd.f32 0.0, %v883
    %885 = vmatmul.bf16.gmra.mxu0 %v648
    %v886 = vpop.f32.mrf.mxu0
    %v887 = vadd.f32 0.0, %v886
    %v888 = vpop.f32.mrf.mxu0
    %v889 = vadd.f32 0.0, %v888
    %890 = vdwg.mxu0
    %891 = vmatpush.bf16.msra.mxu0 %v808
    %892 = vmatpush.bf16.msra.mxu0 %v806
    %893 = vmatpush.bf16.msra.mxu0 %v804
    %894 = vmatpush.bf16.msra.mxu0 %v802
    %895 = vmatpush.bf16.msra.mxu0 %v800
    %896 = vmatpush.bf16.msra.mxu0 %v798
    %897 = vmatpush.bf16.msra.mxu0 %v796
    %898 = vmatpush.bf16.msra.mxu0 %v794
    %899 = vmatmul.bf16.gmra.mxu0 %v635
    %v900 = vpop.f32.mrf.mxu0
    %v901 = vadd.f32 %v852, %v900
    %v902 = vpop.f32.mrf.mxu0
    %v903 = vadd.f32 %v854, %v902
    %904 = vmatmul.bf16.gmra.mxu0 %v637
    %v905 = vpop.f32.mrf.mxu0
    %v906 = vadd.f32 %v857, %v905
    %v907 = vpop.f32.mrf.mxu0
    %v908 = vadd.f32 %v859, %v907
    %909 = vmatmul.bf16.gmra.mxu0 %v639
    %v910 = vpop.f32.mrf.mxu0
    %v911 = vadd.f32 %v862, %v910
    %v912 = vpop.f32.mrf.mxu0
    %v913 = vadd.f32 %v864, %v912
    %914 = vmatmul.bf16.gmra.mxu0 %v641
    %v915 = vpop.f32.mrf.mxu0
    %v916 = vadd.f32 %v867, %v915
    %v917 = vpop.f32.mrf.mxu0
    %v918 = vadd.f32 %v869, %v917
    %919 = vmatmul.bf16.gmra.mxu0 %v643
    %v920 = vpop.f32.mrf.mxu0
    %v921 = vadd.f32 %v872, %v920
    %v922 = vpop.f32.mrf.mxu0
    %v923 = vadd.f32 %v874, %v922
    %924 = vmatmul.bf16.gmra.mxu0 %v645
    %v925 = vpop.f32.mrf.mxu0
    %v926 = vadd.f32 %v877, %v925
    %v927 = vpop.f32.mrf.mxu0
    %v928 = vadd.f32 %v879, %v927
    %929 = vmatmul.bf16.gmra.mxu0 %v647
    %v930 = vpop.f32.mrf.mxu0
    %v931 = vadd.f32 %v882, %v930
    %v932 = vpop.f32.mrf.mxu0
    %v933 = vadd.f32 %v884, %v932
    %934 = vmatmul.bf16.gmra.mxu0 %v649
    %v935 = vpop.f32.mrf.mxu0
    %v936 = vadd.f32 %v887, %v935
    %v937 = vpop.f32.mrf.mxu0
    %v938 = vadd.f32 %v889, %v937
    %939 = vdwg.mxu0
    %940 = vmatpush.bf16.msra.mxu0 %v793
    %941 = vmatpush.bf16.msra.mxu0 %v791
    %942 = vmatpush.bf16.msra.mxu0 %v789
    %943 = vmatpush.bf16.msra.mxu0 %v787
    %944 = vmatpush.bf16.msra.mxu0 %v785
    %945 = vmatpush.bf16.msra.mxu0 %v783
    %946 = vmatpush.bf16.msra.mxu0 %v781
    %947 = vmatpush.bf16.msra.mxu0 %v779
    %948 = vmatmul.bf16.gmra.mxu0 %v634
    %v949 = vpop.f32.mrf.mxu0
    %v950 = vadd.f32 0.0, %v949
    %v951 = vpop.f32.mrf.mxu0
    %v952 = vadd.f32 0.0, %v951
    %953 = vmatmul.bf16.gmra.mxu0 %v636
    %v954 = vpop.f32.mrf.mxu0
    %v955 = vadd.f32 0.0, %v954
    %v956 = vpop.f32.mrf.mxu0
    %v957 = vadd.f32 0.0, %v956
    %958 = vmatmul.bf16.gmra.mxu0 %v638
    %v959 = vpop.f32.mrf.mxu0
    %v960 = vadd.f32 0.0, %v959
    %v961 = vpop.f32.mrf.mxu0
    %v962 = vadd.f32 0.0, %v961
    %963 = vmatmul.bf16.gmra.mxu0 %v640
    %v964 = vpop.f32.mrf.mxu0
    %v965 = vadd.f32 0.0, %v964
    %v966 = vpop.f32.mrf.mxu0
    %v967 = vadd.f32 0.0, %v966
    %968 = vmatmul.bf16.gmra.mxu0 %v642
    %v969 = vpop.f32.mrf.mxu0
    %v970 = vadd.f32 0.0, %v969
    %v971 = vpop.f32.mrf.mxu0
    %v972 = vadd.f32 0.0, %v971
    %973 = vmatmul.bf16.gmra.mxu0 %v644
    %v974 = vpop.f32.mrf.mxu0
    %v975 = vadd.f32 0.0, %v974
    %v976 = vpop.f32.mrf.mxu0
    %v977 = vadd.f32 0.0, %v976
    %978 = vmatmul.bf16.gmra.mxu0 %v646
    %v979 = vpop.f32.mrf.mxu0
    %v980 = vadd.f32 0.0, %v979
    %v981 = vpop.f32.mrf.mxu0
    %v982 = vadd.f32 0.0, %v981
    %983 = vmatmul.bf16.gmra.mxu0 %v648
    %v984 = vpop.f32.mrf.mxu0
    %v985 = vadd.f32 0.0, %v984
    %v986 = vpop.f32.mrf.mxu0
    %v987 = vadd.f32 0.0, %v986
    %988 = vdwg.mxu0
    %989 = vmatpush.bf16.msra.mxu0 %v809
    %990 = vmatpush.bf16.msra.mxu0 %v807
    %991 = vmatpush.bf16.msra.mxu0 %v805
    %992 = vmatpush.bf16.msra.mxu0 %v803
    %993 = vmatpush.bf16.msra.mxu0 %v801
    %994 = vmatpush.bf16.msra.mxu0 %v799
    %995 = vmatpush.bf16.msra.mxu0 %v797
    %996 = vmatpush.bf16.msra.mxu0 %v795
    %997 = vmatmul.bf16.gmra.mxu0 %v635
    %v998 = vpop.f32.mrf.mxu0
    %v999 = vadd.f32 %v950, %v998
    %v1000 = vpop.f32.mrf.mxu0
    %v1001 = vadd.f32 %v952, %v1000
    %1002 = vmatmul.bf16.gmra.mxu0 %v637
    %v1003 = vpop.f32.mrf.mxu0
    %v1004 = vadd.f32 %v955, %v1003
    %v1005 = vpop.f32.mrf.mxu0
    %v1006 = vadd.f32 %v957, %v1005
    %1007 = vmatmul.bf16.gmra.mxu0 %v639
    %v1008 = vpop.f32.mrf.mxu0
    %v1009 = vadd.f32 %v960, %v1008
    %v1010 = vpop.f32.mrf.mxu0
    %v1011 = vadd.f32 %v962, %v1010
    %1012 = vmatmul.bf16.gmra.mxu0 %v641
    %v1013 = vpop.f32.mrf.mxu0
    %v1014 = vadd.f32 %v965, %v1013
    %v1015 = vpop.f32.mrf.mxu0
    %v1016 = vadd.f32 %v967, %v1015
    %1017 = vmatmul.bf16.gmra.mxu0 %v643
    %v1018 = vpop.f32.mrf.mxu0
    %v1019 = vadd.f32 %v970, %v1018
    %v1020 = vpop.f32.mrf.mxu0
    %v1021 = vadd.f32 %v972, %v1020
    %1022 = vmatmul.bf16.gmra.mxu0 %v645
    %v1023 = vpop.f32.mrf.mxu0
    %v1024 = vadd.f32 %v975, %v1023
    %v1025 = vpop.f32.mrf.mxu0
    %v1026 = vadd.f32 %v977, %v1025
    %1027 = vmatmul.bf16.gmra.mxu0 %v647
    %v1028 = vpop.f32.mrf.mxu0
    %v1029 = vadd.f32 %v980, %v1028
    %v1030 = vpop.f32.mrf.mxu0
    %v1031 = vadd.f32 %v982, %v1030
    %1032 = vmatmul.bf16.gmra.mxu0 %v649
    %v1033 = vpop.f32.mrf.mxu0
    %v1034 = vadd.f32 %v985, %v1033
    %v1035 = vpop.f32.mrf.mxu0
    %v1036 = vadd.f32 %v987, %v1035
    %1037 = vdwg.mxu0
    %s1038 = scalar_lea.vmem [#allocation10], 2
    %v1039 = vld [vmem:[%s1038] ss:$8 sm:$0x3]
    %s1040 = scalar_lea.vmem [#allocation10], 3
    %v1041 = vld [vmem:[%s1040] ss:$8 sm:$0x3]
    %v1042 = vadd.f32 %v901, %v903
    %v1043 = vadd.f32 %v1042, %v906
    %v1044 = vadd.f32 %v1043, %v908
    %v1045 = vadd.f32 %v1044, %v911
    %v1046 = vadd.f32 %v1045, %v913
    %v1047 = vadd.f32 %v1046, %v916
    %v1048 = vadd.f32 %v1047, %v918
    %v1049 = vadd.f32 %v1048, %v921
    %v1050 = vadd.f32 %v1049, %v923
    %v1051 = vadd.f32 %v1050, %v926
    %v1052 = vadd.f32 %v1051, %v928
    %v1053 = vadd.f32 %v1052, %v931
    %v1054 = vadd.f32 %v1053, %v933
    %v1055 = vadd.f32 %v1054, %v936
    %v1056 = vadd.f32 %v1055, %v938
    %v1057 = vrot.slane %v1056, 4
    %v1058 = vadd.f32 %v1056, %v1057
    %v1059 = vrot.slane %v1058, 2
    %v1060 = vadd.f32 %v1058, %v1059
    %v1061 = vrot.slane %v1060, 1
    %v1062 = vadd.f32 %v1060, %v1061
    %v1063 = vadd.f32 %v999, %v1001
    %v1064 = vadd.f32 %v1063, %v1004
    %v1065 = vadd.f32 %v1064, %v1006
    %v1066 = vadd.f32 %v1065, %v1009
    %v1067 = vadd.f32 %v1066, %v1011
    %v1068 = vadd.f32 %v1067, %v1014
    %v1069 = vadd.f32 %v1068, %v1016
    %v1070 = vadd.f32 %v1069, %v1019
    %v1071 = vadd.f32 %v1070, %v1021
    %v1072 = vadd.f32 %v1071, %v1024
    %v1073 = vadd.f32 %v1072, %v1026
    %v1074 = vadd.f32 %v1073, %v1029
    %v1075 = vadd.f32 %v1074, %v1031
    %v1076 = vadd.f32 %v1075, %v1034
    %v1077 = vadd.f32 %v1076, %v1036
    %v1078 = vrot.slane %v1077, 4
    %v1079 = vadd.f32 %v1077, %v1078
    %v1080 = vrot.slane %v1079, 2
    %v1081 = vadd.f32 %v1079, %v1080
    %v1082 = vrot.slane %v1081, 1
    %v1083 = vadd.f32 %v1081, %v1082
    %v1084 = vmul.f32 %v1062, %v406
    %v1085 = vmul.f32 %v1083, %v406
    %v1086 = vmul.f32 %v901, %v901
    %v1087 = vmul.f32 %v999, %v999
    %v1088 = vmul.f32 %v903, %v903
    %v1089 = vmul.f32 %v1001, %v1001
    %v1090 = vmul.f32 %v906, %v906
    %v1091 = vmul.f32 %v1004, %v1004
    %v1092 = vmul.f32 %v908, %v908
    %v1093 = vmul.f32 %v1006, %v1006
    %v1094 = vmul.f32 %v911, %v911
    %v1095 = vmul.f32 %v1009, %v1009
    %v1096 = vmul.f32 %v913, %v913
    %v1097 = vmul.f32 %v1011, %v1011
    %v1098 = vmul.f32 %v916, %v916
    %v1099 = vmul.f32 %v1014, %v1014
    %v1100 = vmul.f32 %v918, %v918
    %v1101 = vmul.f32 %v1016, %v1016
    %v1102 = vmul.f32 %v921, %v921
    %v1103 = vmul.f32 %v1019, %v1019
    %v1104 = vmul.f32 %v923, %v923
    %v1105 = vmul.f32 %v1021, %v1021
    %v1106 = vmul.f32 %v926, %v926
    %v1107 = vmul.f32 %v1024, %v1024
    %v1108 = vmul.f32 %v928, %v928
    %v1109 = vmul.f32 %v1026, %v1026
    %v1110 = vmul.f32 %v931, %v931
    %v1111 = vmul.f32 %v1029, %v1029
    %v1112 = vmul.f32 %v933, %v933
    %v1113 = vmul.f32 %v1031, %v1031
    %v1114 = vmul.f32 %v936, %v936
    %v1115 = vmul.f32 %v1034, %v1034
    %v1116 = vmul.f32 %v938, %v938
    %v1117 = vmul.f32 %v1036, %v1036
    %v1118 = vadd.f32 %v1086, %v1088
    %v1119 = vadd.f32 %v1118, %v1090
    %v1120 = vadd.f32 %v1119, %v1092
    %v1121 = vadd.f32 %v1120, %v1094
    %v1122 = vadd.f32 %v1121, %v1096
    %v1123 = vadd.f32 %v1122, %v1098
    %v1124 = vadd.f32 %v1123, %v1100
    %v1125 = vadd.f32 %v1124, %v1102
    %v1126 = vadd.f32 %v1125, %v1104
    %v1127 = vadd.f32 %v1126, %v1106
    %v1128 = vadd.f32 %v1127, %v1108
    %v1129 = vadd.f32 %v1128, %v1110
    %v1130 = vadd.f32 %v1129, %v1112
    %v1131 = vadd.f32 %v1130, %v1114
    %v1132 = vadd.f32 %v1131, %v1116
    %v1133 = vrot.slane %v1132, 4
    %v1134 = vadd.f32 %v1132, %v1133
    %v1135 = vrot.slane %v1134, 2
    %v1136 = vadd.f32 %v1134, %v1135
    %v1137 = vrot.slane %v1136, 1
    %v1138 = vadd.f32 %v1136, %v1137
    %v1139 = vadd.f32 %v1087, %v1089
    %v1140 = vadd.f32 %v1139, %v1091
    %v1141 = vadd.f32 %v1140, %v1093
    %v1142 = vadd.f32 %v1141, %v1095
    %v1143 = vadd.f32 %v1142, %v1097
    %v1144 = vadd.f32 %v1143, %v1099
    %v1145 = vadd.f32 %v1144, %v1101
    %v1146 = vadd.f32 %v1145, %v1103
    %v1147 = vadd.f32 %v1146, %v1105
    %v1148 = vadd.f32 %v1147, %v1107
    %v1149 = vadd.f32 %v1148, %v1109
    %v1150 = vadd.f32 %v1149, %v1111
    %v1151 = vadd.f32 %v1150, %v1113
    %v1152 = vadd.f32 %v1151, %v1115
    %v1153 = vadd.f32 %v1152, %v1117
    %v1154 = vrot.slane %v1153, 4
    %v1155 = vadd.f32 %v1153, %v1154
    %v1156 = vrot.slane %v1155, 2
    %v1157 = vadd.f32 %v1155, %v1156
    %v1158 = vrot.slane %v1157, 1
    %v1159 = vadd.f32 %v1157, %v1158
    %v1160 = vmul.f32 %v1138, %v406
    %v1161 = vmul.f32 %v1159, %v406
    %v1162 = vmul.f32 %v1084, %v1084
    %v1163 = vmul.f32 %v1085, %v1085
    %v1164 = vsub.f32 %v1160, %v1162
    %v1165 = vsub.f32 %v1161, %v1163
    %v1166 = vmax.f32 %v1164, 0.0
    %v1167 = vmax.f32 %v1165, 0.0
    %v1168 = vadd.f32 %v1166, 1e-05
    %v1169 = vadd.f32 %v1167, 1e-05
    %v1170 = vrsqrt.pop %v1168
    %v1171 = vmul.f32 %v1170, %v1168
    %v1172 = vmul.f32 %v1171, %v1170
    %v1173 = vmul.f32 0.5, %v1172
    %v1174 = vsub.f32 1.5, %v1173
    %v1175 = vmul.f32 %v1170, %v1174
    %vm1176 = vweird.f32 %v1168
    %vm1177 = vweird.f32 %v1170
    %vm1178 = vmor %vm1176, %vm1177
    %v1179 = vsel %vm1178, %v1170, %v1175
    %v1180 = vrsqrt.pop %v1169
    %v1181 = vmul.f32 %v1180, %v1169
    %v1182 = vmul.f32 %v1181, %v1180
    %v1183 = vmul.f32 0.5, %v1182
    %v1184 = vsub.f32 1.5, %v1183
    %v1185 = vmul.f32 %v1180, %v1184
    %vm1186 = vweird.f32 %v1169
    %vm1187 = vweird.f32 %v1180
    %vm1188 = vmor %vm1186, %vm1187
    %v1189 = vsel %vm1188, %v1180, %v1185
    %v1192 = vrot.slane %v1189, 7
    %v1193 = vsel %vm516, %v1179, %v1192
    %v1195 = vmul.f32 %v1039, %v1193
    %v1197 = vperm.slane %v1195, 0
    %v1198 = vperm.slane %v1195, 1
    %v1201 = vmul.f32 %v1084, %v1197
    %v1202 = vmul.f32 %v1085, %v1198
    %v1205 = vrot.slane %v1202, 7
    %v1206 = vsel %vm516, %v1201, %v1205
    %v1208 = vsub.f32 %v1041, %v1206
    %v1209 = vmul.f32 %v901, %v1197
    %v1210 = vmul.f32 %v999, %v1198
    %v1211 = vmul.f32 %v903, %v1197
    %v1212 = vmul.f32 %v1001, %v1198
    %v1213 = vmul.f32 %v906, %v1197
    %v1214 = vmul.f32 %v1004, %v1198
    %v1215 = vmul.f32 %v908, %v1197
    %v1216 = vmul.f32 %v1006, %v1198
    %v1217 = vmul.f32 %v911, %v1197
    %v1218 = vmul.f32 %v1009, %v1198
    %v1219 = vmul.f32 %v913, %v1197
    %v1220 = vmul.f32 %v1011, %v1198
    %v1221 = vmul.f32 %v916, %v1197
    %v1222 = vmul.f32 %v1014, %v1198
    %v1223 = vmul.f32 %v918, %v1197
    %v1224 = vmul.f32 %v1016, %v1198
    %v1225 = vmul.f32 %v921, %v1197
    %v1226 = vmul.f32 %v1019, %v1198
    %v1227 = vmul.f32 %v923, %v1197
    %v1228 = vmul.f32 %v1021, %v1198
    %v1229 = vmul.f32 %v926, %v1197
    %v1230 = vmul.f32 %v1024, %v1198
    %v1231 = vmul.f32 %v928, %v1197
    %v1232 = vmul.f32 %v1026, %v1198
    %v1233 = vmul.f32 %v931, %v1197
    %v1234 = vmul.f32 %v1029, %v1198
    %v1235 = vmul.f32 %v933, %v1197
    %v1236 = vmul.f32 %v1031, %v1198
    %v1237 = vmul.f32 %v936, %v1197
    %v1238 = vmul.f32 %v1034, %v1198
    %v1239 = vmul.f32 %v938, %v1197
    %v1240 = vmul.f32 %v1036, %v1198
    %v1242 = vperm.slane %v1208, 0
    %v1243 = vperm.slane %v1208, 1
    %v1246 = vadd.f32 %v1209, %v1242
    %v1247 = vadd.f32 %v1210, %v1243
    %v1248 = vadd.f32 %v1211, %v1242
    %v1249 = vadd.f32 %v1212, %v1243
    %v1250 = vadd.f32 %v1213, %v1242
    %v1251 = vadd.f32 %v1214, %v1243
    %v1252 = vadd.f32 %v1215, %v1242
    %v1253 = vadd.f32 %v1216, %v1243
    %v1254 = vadd.f32 %v1217, %v1242
    %v1255 = vadd.f32 %v1218, %v1243
    %v1256 = vadd.f32 %v1219, %v1242
    %v1257 = vadd.f32 %v1220, %v1243
    %v1258 = vadd.f32 %v1221, %v1242
    %v1259 = vadd.f32 %v1222, %v1243
    %v1260 = vadd.f32 %v1223, %v1242
    %v1261 = vadd.f32 %v1224, %v1243
    %v1262 = vadd.f32 %v1225, %v1242
    %v1263 = vadd.f32 %v1226, %v1243
    %v1264 = vadd.f32 %v1227, %v1242
    %v1265 = vadd.f32 %v1228, %v1243
    %v1266 = vadd.f32 %v1229, %v1242
    %v1267 = vadd.f32 %v1230, %v1243
    %v1268 = vadd.f32 %v1231, %v1242
    %v1269 = vadd.f32 %v1232, %v1243
    %v1270 = vadd.f32 %v1233, %v1242
    %v1271 = vadd.f32 %v1234, %v1243
    %v1272 = vadd.f32 %v1235, %v1242
    %v1273 = vadd.f32 %v1236, %v1243
    %v1274 = vadd.f32 %v1237, %v1242
    %v1275 = vadd.f32 %v1238, %v1243
    %v1276 = vadd.f32 %v1239, %v1242
    %v1277 = vadd.f32 %v1240, %v1243
    %v1278 = vmax.f32 %v1246, 0.0
    %v1279 = vmax.f32 %v1247, 0.0
    %v1280 = vmax.f32 %v1248, 0.0
    %v1281 = vmax.f32 %v1249, 0.0
    %v1282 = vmax.f32 %v1250, 0.0
    %v1283 = vmax.f32 %v1251, 0.0
    %v1284 = vmax.f32 %v1252, 0.0
    %v1285 = vmax.f32 %v1253, 0.0
    %v1286 = vmax.f32 %v1254, 0.0
    %v1287 = vmax.f32 %v1255, 0.0
    %v1288 = vmax.f32 %v1256, 0.0
    %v1289 = vmax.f32 %v1257, 0.0
    %v1290 = vmax.f32 %v1258, 0.0
    %v1291 = vmax.f32 %v1259, 0.0
    %v1292 = vmax.f32 %v1260, 0.0
    %v1293 = vmax.f32 %v1261, 0.0
    %v1294 = vmax.f32 %v1262, 0.0
    %v1295 = vmax.f32 %v1263, 0.0
    %v1296 = vmax.f32 %v1264, 0.0
    %v1297 = vmax.f32 %v1265, 0.0
    %v1298 = vmax.f32 %v1266, 0.0
    %v1299 = vmax.f32 %v1267, 0.0
    %v1300 = vmax.f32 %v1268, 0.0
    %v1301 = vmax.f32 %v1269, 0.0
    %v1302 = vmax.f32 %v1270, 0.0
    %v1303 = vmax.f32 %v1271, 0.0
    %v1304 = vmax.f32 %v1272, 0.0
    %v1305 = vmax.f32 %v1273, 0.0
    %v1306 = vmax.f32 %v1274, 0.0
    %v1307 = vmax.f32 %v1275, 0.0
    %v1308 = vmax.f32 %v1276, 0.0
    %v1309 = vmax.f32 %v1277, 0.0
    %v1310 = vpack.c.bf16 %v1280, %v1278
    %v1311 = vpack.c.bf16 %v1281, %v1279
    %v1312 = vpack.c.bf16 %v1284, %v1282
    %v1313 = vpack.c.bf16 %v1285, %v1283
    %v1314 = vpack.c.bf16 %v1288, %v1286
    %v1315 = vpack.c.bf16 %v1289, %v1287
    %v1316 = vpack.c.bf16 %v1292, %v1290
    %v1317 = vpack.c.bf16 %v1293, %v1291
    %v1318 = vpack.c.bf16 %v1296, %v1294
    %v1319 = vpack.c.bf16 %v1297, %v1295
    %v1320 = vpack.c.bf16 %v1300, %v1298
    %v1321 = vpack.c.bf16 %v1301, %v1299
    %v1322 = vpack.c.bf16 %v1304, %v1302
    %v1323 = vpack.c.bf16 %v1305, %v1303
    %v1324 = vpack.c.bf16 %v1308, %v1306
    %v1325 = vpack.c.bf16 %v1309, %v1307
    %v1326 = vld [vmem:[#allocation8] sm:$0xf]
    %v1327 = vld [vmem:[#allocation8 + $0x4] sm:$0xf]
    %v1328 = vld [vmem:[#allocation8 + $0x8] sm:$0xf]
    %v1329 = vld [vmem:[#allocation8 + $0xc] sm:$0xf]
    %v1330 = vld [vmem:[#allocation8 + $0x10] sm:$0xf]
    %v1331 = vld [vmem:[#allocation8 + $0x14] sm:$0xf]
    %v1332 = vld [vmem:[#allocation8 + $0x18] sm:$0xf]
    %v1333 = vld [vmem:[#allocation8 + $0x1c] sm:$0xf]
    %v1334 = vld [vmem:[#allocation8 + $0x20] sm:$0xf]
    %v1335 = vld [vmem:[#allocation8 + $0x24] sm:$0xf]
    %v1336 = vld [vmem:[#allocation8 + $0x28] sm:$0xf]
    %v1337 = vld [vmem:[#allocation8 + $0x2c] sm:$0xf]
    %v1338 = vld [vmem:[#allocation8 + $0x30] sm:$0xf]
    %v1339 = vld [vmem:[#allocation8 + $0x34] sm:$0xf]
    %v1340 = vld [vmem:[#allocation8 + $0x38] sm:$0xf]
    %v1341 = vld [vmem:[#allocation8 + $0x3c] sm:$0xf]
    %v1342 = vld [vmem:[#allocation8 + $0x40] sm:$0xf]
    %v1343 = vld [vmem:[#allocation8 + $0x44] sm:$0xf]
    %v1344 = vld [vmem:[#allocation8 + $0x48] sm:$0xf]
    %v1345 = vld [vmem:[#allocation8 + $0x4c] sm:$0xf]
    %v1346 = vld [vmem:[#allocation8 + $0x50] sm:$0xf]
    %v1347 = vld [vmem:[#allocation8 + $0x54] sm:$0xf]
    %v1348 = vld [vmem:[#allocation8 + $0x58] sm:$0xf]
    %v1349 = vld [vmem:[#allocation8 + $0x5c] sm:$0xf]
    %v1350 = vld [vmem:[#allocation8 + $0x60] sm:$0xf]
    %v1351 = vld [vmem:[#allocation8 + $0x64] sm:$0xf]
    %v1352 = vld [vmem:[#allocation8 + $0x68] sm:$0xf]
    %v1353 = vld [vmem:[#allocation8 + $0x6c] sm:$0xf]
    %v1354 = vld [vmem:[#allocation8 + $0x70] sm:$0xf]
    %v1355 = vld [vmem:[#allocation8 + $0x74] sm:$0xf]
    %v1356 = vld [vmem:[#allocation8 + $0x78] sm:$0xf]
    %v1357 = vld [vmem:[#allocation8 + $0x7c] sm:$0xf]
    %v1358 = vld [vmem:[#allocation10 + $0x4] ss:$0 sm:$0xff]
    %v1391 = vunpack.c.l.b16 %v1326
    %v1392 = vunpack.c.l.b16 %v1327
    %v1393 = vunpack.c.l.b16 %v1328
    %v1394 = vunpack.c.l.b16 %v1329
    %v1395 = vunpack.c.l.b16 %v1330
    %v1396 = vunpack.c.l.b16 %v1331
    %v1397 = vunpack.c.l.b16 %v1332
    %v1398 = vunpack.c.l.b16 %v1333
    %v1399 = vunpack.c.l.b16 %v1334
    %v1400 = vunpack.c.l.b16 %v1335
    %v1401 = vunpack.c.l.b16 %v1336
    %v1402 = vunpack.c.l.b16 %v1337
    %v1403 = vunpack.c.l.b16 %v1338
    %v1404 = vunpack.c.l.b16 %v1339
    %v1405 = vunpack.c.l.b16 %v1340
    %v1406 = vunpack.c.l.b16 %v1341
    %v1407 = vunpack.c.l.b16 %v1342
    %v1408 = vunpack.c.l.b16 %v1343
    %v1409 = vunpack.c.l.b16 %v1344
    %v1410 = vunpack.c.l.b16 %v1345
    %v1411 = vunpack.c.l.b16 %v1346
    %v1412 = vunpack.c.l.b16 %v1347
    %v1413 = vunpack.c.l.b16 %v1348
    %v1414 = vunpack.c.l.b16 %v1349
    %v1415 = vunpack.c.l.b16 %v1350
    %v1416 = vunpack.c.l.b16 %v1351
    %v1417 = vunpack.c.l.b16 %v1352
    %v1418 = vunpack.c.l.b16 %v1353
    %v1419 = vunpack.c.l.b16 %v1354
    %v1420 = vunpack.c.l.b16 %v1355
    %v1421 = vunpack.c.l.b16 %v1356
    %v1422 = vunpack.c.l.b16 %v1357
    %v1423 = vpack.c.b16 %v1392, %v1391
    %v1424 = vpack.c.b16 %v1394, %v1393
    %v1425 = vpack.c.b16 %v1396, %v1395
    %v1426 = vpack.c.b16 %v1398, %v1397
    %v1427 = vpack.c.b16 %v1400, %v1399
    %v1428 = vpack.c.b16 %v1402, %v1401
    %v1429 = vpack.c.b16 %v1404, %v1403
    %v1430 = vpack.c.b16 %v1406, %v1405
    %v1431 = vpack.c.b16 %v1408, %v1407
    %v1432 = vpack.c.b16 %v1410, %v1409
    %v1433 = vpack.c.b16 %v1412, %v1411
    %v1434 = vpack.c.b16 %v1414, %v1413
    %v1435 = vpack.c.b16 %v1416, %v1415
    %v1436 = vpack.c.b16 %v1418, %v1417
    %v1437 = vpack.c.b16 %v1420, %v1419
    %v1438 = vpack.c.b16 %v1422, %v1421
    %1455 = vmatpush.bf16.msra.mxu0 %v1430
    %1456 = vmatpush.bf16.msra.mxu0 %v1429
    %1457 = vmatpush.bf16.msra.mxu0 %v1428
    %1458 = vmatpush.bf16.msra.mxu0 %v1427
    %1459 = vmatpush.bf16.msra.mxu0 %v1426
    %1460 = vmatpush.bf16.msra.mxu0 %v1425
    %1461 = vmatpush.bf16.msra.mxu0 %v1424
    %1462 = vmatpush.bf16.msra.mxu0 %v1423
    %1463 = vmatmul.bf16.gmra.mxu0 %v1310
    %v1464 = vpop.f32.mrf.mxu0
    %v1465 = vadd.f32 %v1358, %v1464
    %v1466 = vpop.f32.mrf.mxu0
    %v1467 = vadd.f32 %v1358, %v1466
    %1468 = vmatmul.bf16.gmra.mxu0 %v1312
    %v1469 = vpop.f32.mrf.mxu0
    %v1470 = vadd.f32 %v1358, %v1469
    %v1471 = vpop.f32.mrf.mxu0
    %v1472 = vadd.f32 %v1358, %v1471
    %1473 = vmatmul.bf16.gmra.mxu0 %v1314
    %v1474 = vpop.f32.mrf.mxu0
    %v1475 = vadd.f32 %v1358, %v1474
    %v1476 = vpop.f32.mrf.mxu0
    %v1477 = vadd.f32 %v1358, %v1476
    %1478 = vmatmul.bf16.gmra.mxu0 %v1316
    %v1479 = vpop.f32.mrf.mxu0
    %v1480 = vadd.f32 %v1358, %v1479
    %v1481 = vpop.f32.mrf.mxu0
    %v1482 = vadd.f32 %v1358, %v1481
    %1483 = vmatmul.bf16.gmra.mxu0 %v1318
    %v1484 = vpop.f32.mrf.mxu0
    %v1485 = vadd.f32 %v1358, %v1484
    %v1486 = vpop.f32.mrf.mxu0
    %v1487 = vadd.f32 %v1358, %v1486
    %1488 = vmatmul.bf16.gmra.mxu0 %v1320
    %v1489 = vpop.f32.mrf.mxu0
    %v1490 = vadd.f32 %v1358, %v1489
    %v1491 = vpop.f32.mrf.mxu0
    %v1492 = vadd.f32 %v1358, %v1491
    %1493 = vmatmul.bf16.gmra.mxu0 %v1322
    %v1494 = vpop.f32.mrf.mxu0
    %v1495 = vadd.f32 %v1358, %v1494
    %v1496 = vpop.f32.mrf.mxu0
    %v1497 = vadd.f32 %v1358, %v1496
    %1498 = vmatmul.bf16.gmra.mxu0 %v1324
    %v1499 = vpop.f32.mrf.mxu0
    %v1500 = vadd.f32 %v1358, %v1499
    %v1501 = vpop.f32.mrf.mxu0
    %v1502 = vadd.f32 %v1358, %v1501
    %1503 = vdwg.mxu0
    %1504 = vmatpush.bf16.msra.mxu0 %v1438
    %1505 = vmatpush.bf16.msra.mxu0 %v1437
    %1506 = vmatpush.bf16.msra.mxu0 %v1436
    %1507 = vmatpush.bf16.msra.mxu0 %v1435
    %1508 = vmatpush.bf16.msra.mxu0 %v1434
    %1509 = vmatpush.bf16.msra.mxu0 %v1433
    %1510 = vmatpush.bf16.msra.mxu0 %v1432
    %1511 = vmatpush.bf16.msra.mxu0 %v1431
    %1512 = vmatmul.bf16.gmra.mxu0 %v1311
    %v1513 = vpop.f32.mrf.mxu0
    %v1514 = vadd.f32 %v1465, %v1513
    %v1515 = vpop.f32.mrf.mxu0
    %v1516 = vadd.f32 %v1467, %v1515
    %1517 = vmatmul.bf16.gmra.mxu0 %v1313
    %v1518 = vpop.f32.mrf.mxu0
    %v1519 = vadd.f32 %v1470, %v1518
    %v1520 = vpop.f32.mrf.mxu0
    %v1521 = vadd.f32 %v1472, %v1520
    %1522 = vmatmul.bf16.gmra.mxu0 %v1315
    %v1523 = vpop.f32.mrf.mxu0
    %v1524 = vadd.f32 %v1475, %v1523
    %v1525 = vpop.f32.mrf.mxu0
    %v1526 = vadd.f32 %v1477, %v1525
    %1527 = vmatmul.bf16.gmra.mxu0 %v1317
    %v1528 = vpop.f32.mrf.mxu0
    %v1529 = vadd.f32 %v1480, %v1528
    %v1530 = vpop.f32.mrf.mxu0
    %v1531 = vadd.f32 %v1482, %v1530
    %1532 = vmatmul.bf16.gmra.mxu0 %v1319
    %v1533 = vpop.f32.mrf.mxu0
    %v1534 = vadd.f32 %v1485, %v1533
    %v1535 = vpop.f32.mrf.mxu0
    %v1536 = vadd.f32 %v1487, %v1535
    %1537 = vmatmul.bf16.gmra.mxu0 %v1321
    %v1538 = vpop.f32.mrf.mxu0
    %v1539 = vadd.f32 %v1490, %v1538
    %v1540 = vpop.f32.mrf.mxu0
    %v1541 = vadd.f32 %v1492, %v1540
    %1542 = vmatmul.bf16.gmra.mxu0 %v1323
    %v1543 = vpop.f32.mrf.mxu0
    %v1544 = vadd.f32 %v1495, %v1543
    %v1545 = vpop.f32.mrf.mxu0
    %v1546 = vadd.f32 %v1497, %v1545
    %1547 = vmatmul.bf16.gmra.mxu0 %v1325
    %v1548 = vpop.f32.mrf.mxu0
    %v1549 = vadd.f32 %v1500, %v1548
    %v1550 = vpop.f32.mrf.mxu0
    %v1551 = vadd.f32 %v1502, %v1550
    %1552 = vdwg.mxu0
    %1553 = vst [vmem:[#allocation11] sm:$0xff] %v1514
    %1554 = vst [vmem:[#allocation11 + $0x8] sm:$0xff] %v1516
    %1555 = vst [vmem:[#allocation11 + $0x10] sm:$0xff] %v1519
    %1556 = vst [vmem:[#allocation11 + $0x18] sm:$0xff] %v1521
    %1557 = vst [vmem:[#allocation11 + $0x20] sm:$0xff] %v1524
    %1558 = vst [vmem:[#allocation11 + $0x28] sm:$0xff] %v1526
    %1559 = vst [vmem:[#allocation11 + $0x30] sm:$0xff] %v1529
    %1560 = vst [vmem:[#allocation11 + $0x38] sm:$0xff] %v1531
    %1561 = vst [vmem:[#allocation11 + $0x40] sm:$0xff] %v1534
    %1562 = vst [vmem:[#allocation11 + $0x48] sm:$0xff] %v1536
    %1563 = vst [vmem:[#allocation11 + $0x50] sm:$0xff] %v1539
    %1564 = vst [vmem:[#allocation11 + $0x58] sm:$0xff] %v1541
    %1565 = vst [vmem:[#allocation11 + $0x60] sm:$0xff] %v1544
    %1566 = vst [vmem:[#allocation11 + $0x68] sm:$0xff] %v1546
    %1567 = vst [vmem:[#allocation11 + $0x70] sm:$0xff] %v1549
    %1568 = vst [vmem:[#allocation11 + $0x78] sm:$0xff] %v1551
    // Predicated region
    $region42: #{tpu_custom_call.1} parent=1 // pred_check
      _
    $region43: #{tpu_custom_call.1} parent=1 // pred_check_branch
      %1570 = sbr.rel (0) target = $region45
    $region44: #{tpu_custom_call.1} parent=1 // pred_region
      %1572 = vsyncadd [#allocation4], 0
      %s1573 = sshll.u32 [#allocation11], 4
      %s1574 = int_to_ptr.vmem [resolvable:$true] %s1573
      %s1575 = sshll.u32 %s5, 4
      %s1576 = int_to_ptr.hbm [resolvable:$true] %s1575
      %1581 = dma.vmem_to_hbm [thread:$0]  %s1574, 2048, %s1576, [#allocation4], 128, 128, 8
    $region45: #{tpu_custom_call.1} parent=1 // pred_fallthru
      _
    // Predicated region
    $region46: #{tpu_custom_call.1} parent=1 // pred_check
      _
    $region47: #{tpu_custom_call.1} parent=1 // pred_check_branch
      %1583 = sbr.rel (0) target = $region49
    $region48: #{tpu_custom_call.1} parent=1 // pred_region
      %1585 = dma.done [#allocation4], 2048
    $region49: #{tpu_custom_call.1} parent=1 // pred_fallthru
      _
    %1586 = vsyncpa [#allocation3], 1
    %1587 = vsyncpa [#allocation6], 1
    %1588 = vsyncpa [#allocation9], 1
    %1589 = vsyncpa [#allocation4], 1

</llo_original>
